<compile_context>
chip_gen: v7x
topology: tpu7x:2x2x1
jax: 0.10.0
libtpu: 0.0.40
codegen_flags: <defaults>
</compile_context>

<pallas_src>
import math
from functools import partial

import jax
import jax.numpy as jnp
from jax.experimental import pallas as pl
from jax.experimental.pallas import tpu as pltpu


def dit_block_kernel(x_ref,
                     g1_ref, b1_ref,
                     wqkv_ref, bqkv_ref,
                     wo_ref, bo_ref,
                     g2_ref, b2_ref,
                     w1_ref, bm1_ref,
                     w2_ref, bm2_ref,
                     o_ref,
                     *, num_heads, q_tile):
    f32 = jnp.float32
    bf16 = jnp.bfloat16
    eps = 1e-6

    xf = x_ref[0].astype(f32)                 # (S, H) full sequence, this batch
    S, H = xf.shape
    TQ = q_tile
    hd = H // num_heads

    def layer_norm(v, g, b):
        mu = jnp.mean(v, axis=-1, keepdims=True)
        var = jnp.mean((v - mu) ** 2, axis=-1, keepdims=True)
        return (v - mu) * jax.lax.rsqrt(var + eps) * g + b

    # ---- norm1 over the full sequence (K/V need every row) ----
    xnf = layer_norm(xf, g1_ref[...], b1_ref[...])           # (S, H) f32

    if TQ == S:                                   # static: single query tile
        xq, xnq = xf, xnf
    else:
        start = pl.program_id(1) * TQ
        if TQ % 8 == 0:
            start = pl.multiple_of(start, 8)
        xq = jax.lax.dynamic_slice_in_dim(xf, start, TQ, axis=0)
        xnq = jax.lax.dynamic_slice_in_dim(xnf, start, TQ, axis=0)

    # ---- QKV projection (bf16 MXU inputs, f32 accumulation) ----
    w_qkv = wqkv_ref[...]                                    # (H, 3H) bf16
    b_qkv = bqkv_ref[...]                                    # (1, 3H) f32
    xnq_b = xnq.astype(bf16)
    xnf_b = xnf.astype(bf16)

    q = jnp.dot(xnq_b, w_qkv[:, 0:H], preferred_element_type=f32) + b_qkv[:, 0:H]
    kv = jnp.dot(xnf_b, w_qkv[:, H:], preferred_element_type=f32) + b_qkv[:, H:]
    k = kv[:, 0:H]
    v = kv[:, H:]

    q_b = q.astype(bf16)
    k_b = k.astype(bf16)
    v_b = v.astype(bf16)
    wo = wo_ref[...]                                         # (H, H) bf16
    scale = 1.0 / math.sqrt(hd)

    # ---- multi-head self-attention; accumulate per-head out-projection so no
    #      lane-dim concat is needed. ----
    attn = jnp.zeros((TQ, H), f32)
    for h in range(num_heads):                               # static unroll
        sl = slice(h * hd, (h + 1) * hd)
        qh, kh, vh = q_b[:, sl], k_b[:, sl], v_b[:, sl]
        s = jax.lax.dot_general(qh, kh, (((1,), (1,)), ((), ())),
                                preferred_element_type=f32) * scale   # (TQ, S)
        s = s - jnp.max(s, axis=-1, keepdims=True)
        p = jnp.exp(s)
        p = p * pl.reciprocal(jnp.sum(p, axis=-1, keepdims=True), approx=True)
        ho = jnp.dot(p.astype(bf16), vh, preferred_element_type=f32)  # (TQ, hd)
        attn = attn + jnp.dot(ho.astype(bf16), wo[sl, :],
                              preferred_element_type=f32)             # (TQ, H)
    attn = attn + bo_ref[...]

    x1 = xq + attn

    # ---- norm2 + MLP (fc1 -> GELU(tanh) -> fc2) ----
    xn2 = layer_norm(x1, g2_ref[...], b2_ref[...])
    h1 = jnp.dot(xn2.astype(bf16), w1_ref[...],
                 preferred_element_type=f32) + bm1_ref[...]
    c = math.sqrt(2.0 / math.pi)                 # GELU approximate='tanh', f32
    h1 = 0.5 * h1 * (1.0 + jnp.tanh(c * (h1 + 0.044715 * (h1 * h1 * h1))))
    h2 = jnp.dot(h1.astype(bf16), w2_ref[...],
                 preferred_element_type=f32) + bm2_ref[...]

    o_ref[0] = (x1 + h2).astype(o_ref.dtype)


def dit_block(x, params, num_heads, *, q_tile=None):
    B, S, H = x.shape
    M = params["w1"].shape[1]

    # Query-tile size: multiple of 8 rows; fall back to full S for small /
    # non-divisible sequences.
    if q_tile is None:
        q_tile = S if S <= 512 else 512
    if S % q_tile != 0 or (q_tile != S and q_tile % 8 != 0):
        q_tile = S
    nq = S // q_tile

    bf16 = jnp.bfloat16
    wqkv = params["wqkv"].astype(bf16)
    wo = params["wo"].astype(bf16)
    w1 = params["w1"].astype(bf16)
    w2 = params["w2"].astype(bf16)

    def full(shape):
        return pl.BlockSpec(shape, lambda b, q, _r=len(shape): (0,) * _r)

    grid_spec = pltpu.PrefetchScalarGridSpec(
        num_scalar_prefetch=0,
        grid=(B, nq),
        in_specs=[
            pl.BlockSpec((1, S, H), lambda b, q: (b, 0, 0)),   # x (full sequence)
            full((1, H)), full((1, H)),                        # norm1 gamma/beta
            full((H, 3 * H)), full((1, 3 * H)),                # in_proj (W^T, b)
            full((H, H)), full((1, H)),                        # out_proj (W^T, b)
            full((1, H)), full((1, H)),                        # norm2 gamma/beta
            full((H, M)), full((1, M)),                        # mlp fc1 (W^T, b)
            full((M, H)), full((1, H)),                        # mlp fc2 (W^T, b)
        ],
        out_specs=pl.BlockSpec((1, q_tile, H), lambda b, q: (b, q, 0)),
    )

    def nbytes(a):
        return int(a.size) * a.dtype.itemsize

    flops = int(2 * B * S * (3 * H * H + 2 * S * H + H * H + 2 * H * M))
    transcendentals = int(B * S * (S + M))
    bytes_accessed = int(2 * nbytes(x) + nbytes(wqkv) + nbytes(wo)
                         + nbytes(w1) + nbytes(w2))

    kernel = partial(dit_block_kernel, num_heads=num_heads, q_tile=q_tile)
    return pl.pallas_call(
        kernel,
        out_shape=jax.ShapeDtypeStruct((B, S, H), x.dtype),
        grid_spec=grid_spec,
        compiler_params=pltpu.CompilerParams(
            dimension_semantics=("parallel", "parallel"),
            vmem_limit_bytes=56 * 1024 * 1024),
        cost_estimate=pl.CostEstimate(
            flops=flops,
            transcendentals=transcendentals,
            bytes_accessed=bytes_accessed),
    )(x,
      params["g1"], params["b1"],
      wqkv, params["bqkv"],
      wo, params["bo"],
      params["g2"], params["b2"],
      w1, params["bm1"],
      w2, params["bm2"])


def dit_block_ref(x, params, num_heads):
    """Pure-JAX f32 reference for correctness checking."""
    B, S, H = x.shape
    hd = H // num_heads
    eps = 1e-6

    def ln(v, g, b):
        mu = jnp.mean(v, axis=-1, keepdims=True)
        var = jnp.mean((v - mu) ** 2, axis=-1, keepdims=True)
        return (v - mu) / jnp.sqrt(var + eps) * g + b

    xn = ln(x, params["g1"][0], params["b1"][0])
    qkv = xn @ params["wqkv"] + params["bqkv"][0]
    q, k, v = jnp.split(qkv, 3, axis=-1)
    q = q.reshape(B, S, num_heads, hd).transpose(0, 2, 1, 3) / math.sqrt(hd)
    k = k.reshape(B, S, num_heads, hd).transpose(0, 2, 1, 3)
    v = v.reshape(B, S, num_heads, hd).transpose(0, 2, 1, 3)
    s = jnp.einsum("bhqd,bhkd->bhqk", q, k)
    p = jax.nn.softmax(s, axis=-1)
    a = jnp.einsum("bhqk,bhkd->bhqd", p, v).transpose(0, 2, 1, 3).reshape(B, S, H)
    a = a @ params["wo"] + params["bo"][0]
    x1 = x + a
    xn2 = ln(x1, params["g2"][0], params["b2"][0])
    h1 = xn2 @ params["w1"] + params["bm1"][0]
    h1 = jax.nn.gelu(h1, approximate=True)
    h2 = h1 @ params["w2"] + params["bm2"][0]
    return x1 + h2


if __name__ == "__main__":
    B, S, H = 2, 8, 32
    num_heads = 4
    mlp_ratio = 4.0
    M = int(H * mlp_ratio)

    key = jax.random.PRNGKey(0)
    keys = jax.random.split(key, 13)

    params = {
        # LayerNorm affine params
        "g1": 1.0 + 0.1 * jax.random.normal(keys[0], (1, H), jnp.float32),
        "b1": 0.1 * jax.random.normal(keys[1], (1, H), jnp.float32),
        "g2": 1.0 + 0.1 * jax.random.normal(keys[2], (1, H), jnp.float32),
        "b2": 0.1 * jax.random.normal(keys[3], (1, H), jnp.float32),
        # MultiheadAttention in_proj / out_proj (stored pre-transposed: y = x @ W)
        "wqkv": 0.05 * jax.random.normal(keys[4], (H, 3 * H), jnp.float32),
        "bqkv": 0.02 * jax.random.normal(keys[5], (1, 3 * H), jnp.float32),
        "wo": 0.05 * jax.random.normal(keys[6], (H, H), jnp.float32),
        "bo": 0.02 * jax.random.normal(keys[7], (1, H), jnp.float32),
        # MLP fc1 / fc2 (pre-transposed)
        "w1": 0.05 * jax.random.normal(keys[8], (H, M), jnp.float32),
        "bm1": 0.02 * jax.random.normal(keys[9], (1, M), jnp.float32),
        "w2": 0.05 * jax.random.normal(keys[10], (M, H), jnp.float32),
        "bm2": 0.02 * jax.random.normal(keys[11], (1, H), jnp.float32),
    }

    x = jax.random.normal(keys[12], (B, S, H), jnp.float32)

    out = dit_block(x, params, num_heads)
    out = jax.block_until_ready(out)

    ref = dit_block_ref(x, params, num_heads)
    assert out.shape == (B, S, H)
    # bf16 MXU inputs + approx reciprocal vs f32 reference -> loose tolerance.
    assert jnp.allclose(out, ref, atol=2e-2, rtol=2e-2), "mismatch vs reference"

    print("KERNEL_OK")
</pallas_src>

<mosaic_0001>
module attributes {stable_mosaic.version = 11 : i64} {
  func.func @dit_block_kernel(%arg0: i32, %arg1: i32, %arg2: memref<1x8x32xf32, #tpu.memory_space<vmem>>, %arg3: memref<1x32xf32, #tpu.memory_space<vmem>>, %arg4: memref<1x32xf32, #tpu.memory_space<vmem>>, %arg5: memref<32x96xbf16, #tpu.memory_space<vmem>>, %arg6: memref<1x96xf32, #tpu.memory_space<vmem>>, %arg7: memref<32x32xbf16, #tpu.memory_space<vmem>>, %arg8: memref<1x32xf32, #tpu.memory_space<vmem>>, %arg9: memref<1x32xf32, #tpu.memory_space<vmem>>, %arg10: memref<1x32xf32, #tpu.memory_space<vmem>>, %arg11: memref<32x128xbf16, #tpu.memory_space<vmem>>, %arg12: memref<1x128xf32, #tpu.memory_space<vmem>>, %arg13: memref<128x32xbf16, #tpu.memory_space<vmem>>, %arg14: memref<1x32xf32, #tpu.memory_space<vmem>>, %arg15: memref<1x8x32xf32, #tpu.memory_space<vmem>>) attributes {dimension_semantics = [#tpu.dimension_semantics<parallel>, #tpu.dimension_semantics<parallel>], iteration_bounds = array<i64: 2, 1>, scalar_prefetch = 0 : i64, scratch_operands = 0 : i64, tpu.core_type = #tpu.core_type<tc>, window_params = [{transform_indices = @transform_0, window_bounds = array<i64: 1, 8, 32>}, {pipeline_mode = #tpu.pipeline_mode<synchronous>, transform_indices = @transform_1, window_bounds = array<i64: 1, 32>}, {pipeline_mode = #tpu.pipeline_mode<synchronous>, transform_indices = @transform_2, window_bounds = array<i64: 1, 32>}, {pipeline_mode = #tpu.pipeline_mode<synchronous>, transform_indices = @transform_3, window_bounds = array<i64: 32, 96>}, {pipeline_mode = #tpu.pipeline_mode<synchronous>, transform_indices = @transform_4, window_bounds = array<i64: 1, 96>}, {pipeline_mode = #tpu.pipeline_mode<synchronous>, transform_indices = @transform_5, window_bounds = array<i64: 32, 32>}, {pipeline_mode = #tpu.pipeline_mode<synchronous>, transform_indices = @transform_6, window_bounds = array<i64: 1, 32>}, {pipeline_mode = #tpu.pipeline_mode<synchronous>, transform_indices = @transform_7, window_bounds = array<i64: 1, 32>}, {pipeline_mode = #tpu.pipeline_mode<synchronous>, transform_indices = @transform_8, window_bounds = array<i64: 1, 32>}, {pipeline_mode = #tpu.pipeline_mode<synchronous>, transform_indices = @transform_9, window_bounds = array<i64: 32, 128>}, {pipeline_mode = #tpu.pipeline_mode<synchronous>, transform_indices = @transform_10, window_bounds = array<i64: 1, 128>}, {pipeline_mode = #tpu.pipeline_mode<synchronous>, transform_indices = @transform_11, window_bounds = array<i64: 128, 32>}, {pipeline_mode = #tpu.pipeline_mode<synchronous>, transform_indices = @transform_12, window_bounds = array<i64: 1, 32>}, {transform_indices = @transform_13, window_bounds = array<i64: 1, 8, 32>}]} {
    %c0 = arith.constant 0 : index
    %c0_0 = arith.constant 0 : index
    %c0_1 = arith.constant 0 : index
    %0 = vector.load %arg2[%c0, %c0_0, %c0_1] : memref<1x8x32xf32, #tpu.memory_space<vmem>>, vector<1x8x32xf32>
    %1 = vector.shape_cast %0 : vector<1x8x32xf32> to vector<8x32xf32>
    %c0_2 = arith.constant 0 : index
    %c0_3 = arith.constant 0 : index
    %2 = vector.load %arg3[%c0_2, %c0_3] : memref<1x32xf32, #tpu.memory_space<vmem>>, vector<1x32xf32>
    %c0_4 = arith.constant 0 : index
    %c0_5 = arith.constant 0 : index
    %3 = vector.load %arg4[%c0_4, %c0_5] : memref<1x32xf32, #tpu.memory_space<vmem>>, vector<1x32xf32>
    %cst = arith.constant dense<0.000000e+00> : vector<8xf32>
    %4 = vector.multi_reduction <add>, %1, %cst [1] : vector<8x32xf32> to vector<8xf32>
    %5 = vector.shape_cast %4 : vector<8xf32> to vector<8x1xf32>
    %cst_6 = arith.constant 3.200000e+01 : f32
    %6 = vector.broadcast %cst_6 : f32 to vector<8x1xf32>
    %7 = arith.divf %5, %6 : vector<8x1xf32>
    %8 = vector.broadcast %7 : vector<8x1xf32> to vector<8x32xf32>
    %9 = arith.subf %1, %8 : vector<8x32xf32>
    %10 = arith.mulf %9, %9 : vector<8x32xf32>
    %cst_7 = arith.constant dense<0.000000e+00> : vector<8xf32>
    %11 = vector.multi_reduction <add>, %10, %cst_7 [1] : vector<8x32xf32> to vector<8xf32>
    %12 = vector.shape_cast %11 : vector<8xf32> to vector<8x1xf32>
    %cst_8 = arith.constant 3.200000e+01 : f32
    %13 = vector.broadcast %cst_8 : f32 to vector<8x1xf32>
    %14 = arith.divf %12, %13 : vector<8x1xf32>
    %15 = vector.broadcast %7 : vector<8x1xf32> to vector<8x32xf32>
    %16 = arith.subf %1, %15 : vector<8x32xf32>
    %cst_9 = arith.constant 9.99999997E-7 : f32
    %17 = vector.broadcast %cst_9 : f32 to vector<8x1xf32>
    %18 = arith.addf %14, %17 : vector<8x1xf32>
    %19 = math.rsqrt %18 : vector<8x1xf32>
    %20 = vector.broadcast %19 : vector<8x1xf32> to vector<8x32xf32>
    %21 = arith.mulf %16, %20 : vector<8x32xf32>
    %22 = vector.broadcast %2 : vector<1x32xf32> to vector<8x32xf32>
    %23 = arith.mulf %21, %22 : vector<8x32xf32>
    %24 = vector.broadcast %3 : vector<1x32xf32> to vector<8x32xf32>
    %25 = arith.addf %23, %24 : vector<8x32xf32>
    %c0_10 = arith.constant 0 : index
    %c0_11 = arith.constant 0 : index
    %26 = vector.load %arg5[%c0_10, %c0_11] : memref<32x96xbf16, #tpu.memory_space<vmem>>, vector<32x96xbf16>
    %c0_12 = arith.constant 0 : index
    %c0_13 = arith.constant 0 : index
    %27 = vector.load %arg6[%c0_12, %c0_13] : memref<1x96xf32, #tpu.memory_space<vmem>>, vector<1x96xf32>
    %28 = arith.truncf %25 : vector<8x32xf32> to vector<8x32xbf16>
    %29 = arith.truncf %25 : vector<8x32xf32> to vector<8x32xbf16>
    %30 = vector.extract_strided_slice %26 {offsets = [0, 0], sizes = [32, 32], strides = [1, 1]} : vector<32x96xbf16> to vector<32x32xbf16>
    %cst_14 = arith.constant dense<0.000000e+00> : vector<8x32xf32>
    %31 = tpu.matmul %28, %30, %cst_14 {dimension_numbers = #tpu.dot_dimension_numbers<[1], [0], [0], [1], [0, 0, 1, 1], [], []>} : vector<8x32xbf16>, vector<32x32xbf16>, vector<8x32xf32> -> vector<8x32xf32>
    %32 = vector.extract_strided_slice %27 {offsets = [0, 0], sizes = [1, 32], strides = [1, 1]} : vector<1x96xf32> to vector<1x32xf32>
    %33 = vector.broadcast %32 : vector<1x32xf32> to vector<8x32xf32>
    %34 = arith.addf %31, %33 : vector<8x32xf32>
    %35 = vector.extract_strided_slice %26 {offsets = [0, 32], sizes = [32, 64], strides = [1, 1]} : vector<32x96xbf16> to vector<32x64xbf16>
    %cst_15 = arith.constant dense<0.000000e+00> : vector<8x64xf32>
    %36 = tpu.matmul %29, %35, %cst_15 {dimension_numbers = #tpu.dot_dimension_numbers<[1], [0], [0], [1], [0, 0, 1, 1], [], []>} : vector<8x32xbf16>, vector<32x64xbf16>, vector<8x64xf32> -> vector<8x64xf32>
    %37 = vector.extract_strided_slice %27 {offsets = [0, 32], sizes = [1, 64], strides = [1, 1]} : vector<1x96xf32> to vector<1x64xf32>
    %38 = vector.broadcast %37 : vector<1x64xf32> to vector<8x64xf32>
    %39 = arith.addf %36, %38 : vector<8x64xf32>
    %40 = vector.extract_strided_slice %39 {offsets = [0, 0], sizes = [8, 32], strides = [1, 1]} : vector<8x64xf32> to vector<8x32xf32>
    %41 = vector.extract_strided_slice %39 {offsets = [0, 32], sizes = [8, 32], strides = [1, 1]} : vector<8x64xf32> to vector<8x32xf32>
    %42 = arith.truncf %34 : vector<8x32xf32> to vector<8x32xbf16>
    %43 = arith.truncf %40 : vector<8x32xf32> to vector<8x32xbf16>
    %44 = arith.truncf %41 : vector<8x32xf32> to vector<8x32xbf16>
    %c0_16 = arith.constant 0 : index
    %c0_17 = arith.constant 0 : index
    %45 = vector.load %arg7[%c0_16, %c0_17] : memref<32x32xbf16, #tpu.memory_space<vmem>>, vector<32x32xbf16>
    %cst_18 = arith.constant 0.000000e+00 : f32
    %46 = vector.broadcast %cst_18 : f32 to vector<8x32xf32>
    %47 = vector.extract_strided_slice %42 {offsets = [0, 0], sizes = [8, 8], strides = [1, 1]} : vector<8x32xbf16> to vector<8x8xbf16>
    %48 = vector.extract_strided_slice %43 {offsets = [0, 0], sizes = [8, 8], strides = [1, 1]} : vector<8x32xbf16> to vector<8x8xbf16>
    %49 = vector.extract_strided_slice %44 {offsets = [0, 0], sizes = [8, 8], strides = [1, 1]} : vector<8x32xbf16> to vector<8x8xbf16>
    %cst_19 = arith.constant dense<0.000000e+00> : vector<8x8xf32>
    %50 = tpu.matmul %47, %48, %cst_19 {dimension_numbers = #tpu.dot_dimension_numbers<[1], [1], [0], [0], [0, 0, 1, 0], [], []>} : vector<8x8xbf16>, vector<8x8xbf16>, vector<8x8xf32> -> vector<8x8xf32>
    %cst_20 = arith.constant 0.353553385 : f32
    %51 = vector.broadcast %cst_20 : f32 to vector<8x8xf32>
    %52 = arith.mulf %50, %51 : vector<8x8xf32>
    %cst_21 = arith.constant dense<0xFF800000> : vector<8xf32>
    %53 = vector.multi_reduction <maximumf>, %52, %cst_21 [1] : vector<8x8xf32> to vector<8xf32>
    %54 = vector.shape_cast %53 : vector<8xf32> to vector<8x1xf32>
    %55 = vector.broadcast %54 : vector<8x1xf32> to vector<8x8xf32>
    %56 = arith.subf %52, %55 : vector<8x8xf32>
    %57 = math.exp %56 : vector<8x8xf32>
    %cst_22 = arith.constant dense<0.000000e+00> : vector<8xf32>
    %58 = vector.multi_reduction <add>, %57, %cst_22 [1] : vector<8x8xf32> to vector<8xf32>
    %59 = vector.shape_cast %58 : vector<8xf32> to vector<8x1xf32>
    %60 = tpu.reciprocal %59 {approx = true} : vector<8x1xf32> -> vector<8x1xf32>
    %61 = vector.broadcast %60 : vector<8x1xf32> to vector<8x8xf32>
    %62 = arith.mulf %57, %61 : vector<8x8xf32>
    %63 = arith.truncf %62 : vector<8x8xf32> to vector<8x8xbf16>
    %cst_23 = arith.constant dense<0.000000e+00> : vector<8x8xf32>
    %64 = tpu.matmul %63, %49, %cst_23 {dimension_numbers = #tpu.dot_dimension_numbers<[1], [0], [0], [1], [0, 0, 1, 1], [], []>} : vector<8x8xbf16>, vector<8x8xbf16>, vector<8x8xf32> -> vector<8x8xf32>
    %65 = arith.truncf %64 : vector<8x8xf32> to vector<8x8xbf16>
    %66 = vector.extract_strided_slice %45 {offsets = [0, 0], sizes = [8, 32], strides = [1, 1]} : vector<32x32xbf16> to vector<8x32xbf16>
    %cst_24 = arith.constant dense<0.000000e+00> : vector<8x32xf32>
    %67 = tpu.matmul %65, %66, %cst_24 {dimension_numbers = #tpu.dot_dimension_numbers<[1], [0], [0], [1], [0, 0, 1, 1], [], []>} : vector<8x8xbf16>, vector<8x32xbf16>, vector<8x32xf32> -> vector<8x32xf32>
    %68 = arith.addf %46, %67 : vector<8x32xf32>
    %69 = vector.extract_strided_slice %42 {offsets = [0, 8], sizes = [8, 8], strides = [1, 1]} : vector<8x32xbf16> to vector<8x8xbf16>
    %70 = vector.extract_strided_slice %43 {offsets = [0, 8], sizes = [8, 8], strides = [1, 1]} : vector<8x32xbf16> to vector<8x8xbf16>
    %71 = vector.extract_strided_slice %44 {offsets = [0, 8], sizes = [8, 8], strides = [1, 1]} : vector<8x32xbf16> to vector<8x8xbf16>
    %cst_25 = arith.constant dense<0.000000e+00> : vector<8x8xf32>
    %72 = tpu.matmul %69, %70, %cst_25 {dimension_numbers = #tpu.dot_dimension_numbers<[1], [1], [0], [0], [0, 0, 1, 0], [], []>} : vector<8x8xbf16>, vector<8x8xbf16>, vector<8x8xf32> -> vector<8x8xf32>
    %cst_26 = arith.constant 0.353553385 : f32
    %73 = vector.broadcast %cst_26 : f32 to vector<8x8xf32>
    %74 = arith.mulf %72, %73 : vector<8x8xf32>
    %cst_27 = arith.constant dense<0xFF800000> : vector<8xf32>
    %75 = vector.multi_reduction <maximumf>, %74, %cst_27 [1] : vector<8x8xf32> to vector<8xf32>
    %76 = vector.shape_cast %75 : vector<8xf32> to vector<8x1xf32>
    %77 = vector.broadcast %76 : vector<8x1xf32> to vector<8x8xf32>
    %78 = arith.subf %74, %77 : vector<8x8xf32>
    %79 = math.exp %78 : vector<8x8xf32>
    %cst_28 = arith.constant dense<0.000000e+00> : vector<8xf32>
    %80 = vector.multi_reduction <add>, %79, %cst_28 [1] : vector<8x8xf32> to vector<8xf32>
    %81 = vector.shape_cast %80 : vector<8xf32> to vector<8x1xf32>
    %82 = tpu.reciprocal %81 {approx = true} : vector<8x1xf32> -> vector<8x1xf32>
    %83 = vector.broadcast %82 : vector<8x1xf32> to vector<8x8xf32>
    %84 = arith.mulf %79, %83 : vector<8x8xf32>
    %85 = arith.truncf %84 : vector<8x8xf32> to vector<8x8xbf16>
    %cst_29 = arith.constant dense<0.000000e+00> : vector<8x8xf32>
    %86 = tpu.matmul %85, %71, %cst_29 {dimension_numbers = #tpu.dot_dimension_numbers<[1], [0], [0], [1], [0, 0, 1, 1], [], []>} : vector<8x8xbf16>, vector<8x8xbf16>, vector<8x8xf32> -> vector<8x8xf32>
    %87 = arith.truncf %86 : vector<8x8xf32> to vector<8x8xbf16>
    %88 = vector.extract_strided_slice %45 {offsets = [8, 0], sizes = [8, 32], strides = [1, 1]} : vector<32x32xbf16> to vector<8x32xbf16>
    %cst_30 = arith.constant dense<0.000000e+00> : vector<8x32xf32>
    %89 = tpu.matmul %87, %88, %cst_30 {dimension_numbers = #tpu.dot_dimension_numbers<[1], [0], [0], [1], [0, 0, 1, 1], [], []>} : vector<8x8xbf16>, vector<8x32xbf16>, vector<8x32xf32> -> vector<8x32xf32>
    %90 = arith.addf %68, %89 : vector<8x32xf32>
    %91 = vector.extract_strided_slice %42 {offsets = [0, 16], sizes = [8, 8], strides = [1, 1]} : vector<8x32xbf16> to vector<8x8xbf16>
    %92 = vector.extract_strided_slice %43 {offsets = [0, 16], sizes = [8, 8], strides = [1, 1]} : vector<8x32xbf16> to vector<8x8xbf16>
    %93 = vector.extract_strided_slice %44 {offsets = [0, 16], sizes = [8, 8], strides = [1, 1]} : vector<8x32xbf16> to vector<8x8xbf16>
    %cst_31 = arith.constant dense<0.000000e+00> : vector<8x8xf32>
    %94 = tpu.matmul %91, %92, %cst_31 {dimension_numbers = #tpu.dot_dimension_numbers<[1], [1], [0], [0], [0, 0, 1, 0], [], []>} : vector<8x8xbf16>, vector<8x8xbf16>, vector<8x8xf32> -> vector<8x8xf32>
    %cst_32 = arith.constant 0.353553385 : f32
    %95 = vector.broadcast %cst_32 : f32 to vector<8x8xf32>
    %96 = arith.mulf %94, %95 : vector<8x8xf32>
    %cst_33 = arith.constant dense<0xFF800000> : vector<8xf32>
    %97 = vector.multi_reduction <maximumf>, %96, %cst_33 [1] : vector<8x8xf32> to vector<8xf32>
    %98 = vector.shape_cast %97 : vector<8xf32> to vector<8x1xf32>
    %99 = vector.broadcast %98 : vector<8x1xf32> to vector<8x8xf32>
    %100 = arith.subf %96, %99 : vector<8x8xf32>
    %101 = math.exp %100 : vector<8x8xf32>
    %cst_34 = arith.constant dense<0.000000e+00> : vector<8xf32>
    %102 = vector.multi_reduction <add>, %101, %cst_34 [1] : vector<8x8xf32> to vector<8xf32>
    %103 = vector.shape_cast %102 : vector<8xf32> to vector<8x1xf32>
    %104 = tpu.reciprocal %103 {approx = true} : vector<8x1xf32> -> vector<8x1xf32>
    %105 = vector.broadcast %104 : vector<8x1xf32> to vector<8x8xf32>
    %106 = arith.mulf %101, %105 : vector<8x8xf32>
    %107 = arith.truncf %106 : vector<8x8xf32> to vector<8x8xbf16>
    %cst_35 = arith.constant dense<0.000000e+00> : vector<8x8xf32>
    %108 = tpu.matmul %107, %93, %cst_35 {dimension_numbers = #tpu.dot_dimension_numbers<[1], [0], [0], [1], [0, 0, 1, 1], [], []>} : vector<8x8xbf16>, vector<8x8xbf16>, vector<8x8xf32> -> vector<8x8xf32>
    %109 = arith.truncf %108 : vector<8x8xf32> to vector<8x8xbf16>
    %110 = vector.extract_strided_slice %45 {offsets = [16, 0], sizes = [8, 32], strides = [1, 1]} : vector<32x32xbf16> to vector<8x32xbf16>
    %cst_36 = arith.constant dense<0.000000e+00> : vector<8x32xf32>
    %111 = tpu.matmul %109, %110, %cst_36 {dimension_numbers = #tpu.dot_dimension_numbers<[1], [0], [0], [1], [0, 0, 1, 1], [], []>} : vector<8x8xbf16>, vector<8x32xbf16>, vector<8x32xf32> -> vector<8x32xf32>
    %112 = arith.addf %90, %111 : vector<8x32xf32>
    %113 = vector.extract_strided_slice %42 {offsets = [0, 24], sizes = [8, 8], strides = [1, 1]} : vector<8x32xbf16> to vector<8x8xbf16>
    %114 = vector.extract_strided_slice %43 {offsets = [0, 24], sizes = [8, 8], strides = [1, 1]} : vector<8x32xbf16> to vector<8x8xbf16>
    %115 = vector.extract_strided_slice %44 {offsets = [0, 24], sizes = [8, 8], strides = [1, 1]} : vector<8x32xbf16> to vector<8x8xbf16>
    %cst_37 = arith.constant dense<0.000000e+00> : vector<8x8xf32>
    %116 = tpu.matmul %113, %114, %cst_37 {dimension_numbers = #tpu.dot_dimension_numbers<[1], [1], [0], [0], [0, 0, 1, 0], [], []>} : vector<8x8xbf16>, vector<8x8xbf16>, vector<8x8xf32> -> vector<8x8xf32>
    %cst_38 = arith.constant 0.353553385 : f32
    %117 = vector.broadcast %cst_38 : f32 to vector<8x8xf32>
    %118 = arith.mulf %116, %117 : vector<8x8xf32>
    %cst_39 = arith.constant dense<0xFF800000> : vector<8xf32>
    %119 = vector.multi_reduction <maximumf>, %118, %cst_39 [1] : vector<8x8xf32> to vector<8xf32>
    %120 = vector.shape_cast %119 : vector<8xf32> to vector<8x1xf32>
    %121 = vector.broadcast %120 : vector<8x1xf32> to vector<8x8xf32>
    %122 = arith.subf %118, %121 : vector<8x8xf32>
    %123 = math.exp %122 : vector<8x8xf32>
    %cst_40 = arith.constant dense<0.000000e+00> : vector<8xf32>
    %124 = vector.multi_reduction <add>, %123, %cst_40 [1] : vector<8x8xf32> to vector<8xf32>
    %125 = vector.shape_cast %124 : vector<8xf32> to vector<8x1xf32>
    %126 = tpu.reciprocal %125 {approx = true} : vector<8x1xf32> -> vector<8x1xf32>
    %127 = vector.broadcast %126 : vector<8x1xf32> to vector<8x8xf32>
    %128 = arith.mulf %123, %127 : vector<8x8xf32>
    %129 = arith.truncf %128 : vector<8x8xf32> to vector<8x8xbf16>
    %cst_41 = arith.constant dense<0.000000e+00> : vector<8x8xf32>
    %130 = tpu.matmul %129, %115, %cst_41 {dimension_numbers = #tpu.dot_dimension_numbers<[1], [0], [0], [1], [0, 0, 1, 1], [], []>} : vector<8x8xbf16>, vector<8x8xbf16>, vector<8x8xf32> -> vector<8x8xf32>
    %131 = arith.truncf %130 : vector<8x8xf32> to vector<8x8xbf16>
    %132 = vector.extract_strided_slice %45 {offsets = [24, 0], sizes = [8, 32], strides = [1, 1]} : vector<32x32xbf16> to vector<8x32xbf16>
    %cst_42 = arith.constant dense<0.000000e+00> : vector<8x32xf32>
    %133 = tpu.matmul %131, %132, %cst_42 {dimension_numbers = #tpu.dot_dimension_numbers<[1], [0], [0], [1], [0, 0, 1, 1], [], []>} : vector<8x8xbf16>, vector<8x32xbf16>, vector<8x32xf32> -> vector<8x32xf32>
    %134 = arith.addf %112, %133 : vector<8x32xf32>
    %c0_43 = arith.constant 0 : index
    %c0_44 = arith.constant 0 : index
    %135 = vector.load %arg8[%c0_43, %c0_44] : memref<1x32xf32, #tpu.memory_space<vmem>>, vector<1x32xf32>
    %136 = vector.broadcast %135 : vector<1x32xf32> to vector<8x32xf32>
    %137 = arith.addf %134, %136 : vector<8x32xf32>
    %138 = arith.addf %1, %137 : vector<8x32xf32>
    %c0_45 = arith.constant 0 : index
    %c0_46 = arith.constant 0 : index
    %139 = vector.load %arg9[%c0_45, %c0_46] : memref<1x32xf32, #tpu.memory_space<vmem>>, vector<1x32xf32>
    %c0_47 = arith.constant 0 : index
    %c0_48 = arith.constant 0 : index
    %140 = vector.load %arg10[%c0_47, %c0_48] : memref<1x32xf32, #tpu.memory_space<vmem>>, vector<1x32xf32>
    %cst_49 = arith.constant dense<0.000000e+00> : vector<8xf32>
    %141 = vector.multi_reduction <add>, %138, %cst_49 [1] : vector<8x32xf32> to vector<8xf32>
    %142 = vector.shape_cast %141 : vector<8xf32> to vector<8x1xf32>
    %cst_50 = arith.constant 3.200000e+01 : f32
    %143 = vector.broadcast %cst_50 : f32 to vector<8x1xf32>
    %144 = arith.divf %142, %143 : vector<8x1xf32>
    %145 = vector.broadcast %144 : vector<8x1xf32> to vector<8x32xf32>
    %146 = arith.subf %138, %145 : vector<8x32xf32>
    %147 = arith.mulf %146, %146 : vector<8x32xf32>
    %cst_51 = arith.constant dense<0.000000e+00> : vector<8xf32>
    %148 = vector.multi_reduction <add>, %147, %cst_51 [1] : vector<8x32xf32> to vector<8xf32>
    %149 = vector.shape_cast %148 : vector<8xf32> to vector<8x1xf32>
    %cst_52 = arith.constant 3.200000e+01 : f32
    %150 = vector.broadcast %cst_52 : f32 to vector<8x1xf32>
    %151 = arith.divf %149, %150 : vector<8x1xf32>
    %152 = vector.broadcast %144 : vector<8x1xf32> to vector<8x32xf32>
    %153 = arith.subf %138, %152 : vector<8x32xf32>
    %cst_53 = arith.constant 9.99999997E-7 : f32
    %154 = vector.broadcast %cst_53 : f32 to vector<8x1xf32>
    %155 = arith.addf %151, %154 : vector<8x1xf32>
    %156 = math.rsqrt %155 : vector<8x1xf32>
    %157 = vector.broadcast %156 : vector<8x1xf32> to vector<8x32xf32>
    %158 = arith.mulf %153, %157 : vector<8x32xf32>
    %159 = vector.broadcast %139 : vector<1x32xf32> to vector<8x32xf32>
    %160 = arith.mulf %158, %159 : vector<8x32xf32>
    %161 = vector.broadcast %140 : vector<1x32xf32> to vector<8x32xf32>
    %162 = arith.addf %160, %161 : vector<8x32xf32>
    %163 = arith.truncf %162 : vector<8x32xf32> to vector<8x32xbf16>
    %c0_54 = arith.constant 0 : index
    %c0_55 = arith.constant 0 : index
    %164 = vector.load %arg11[%c0_54, %c0_55] : memref<32x128xbf16, #tpu.memory_space<vmem>>, vector<32x128xbf16>
    %cst_56 = arith.constant dense<0.000000e+00> : vector<8x128xf32>
    %165 = tpu.matmul %163, %164, %cst_56 {dimension_numbers = #tpu.dot_dimension_numbers<[1], [0], [0], [1], [0, 0, 1, 1], [], []>} : vector<8x32xbf16>, vector<32x128xbf16>, vector<8x128xf32> -> vector<8x128xf32>
    %c0_57 = arith.constant 0 : index
    %c0_58 = arith.constant 0 : index
    %166 = vector.load %arg12[%c0_57, %c0_58] : memref<1x128xf32, #tpu.memory_space<vmem>>, vector<1x128xf32>
    %167 = vector.broadcast %166 : vector<1x128xf32> to vector<8x128xf32>
    %168 = arith.addf %165, %167 : vector<8x128xf32>
    %cst_59 = arith.constant 5.000000e-01 : f32
    %169 = vector.broadcast %cst_59 : f32 to vector<8x128xf32>
    %170 = arith.mulf %169, %168 : vector<8x128xf32>
    %171 = arith.mulf %168, %168 : vector<8x128xf32>
    %172 = arith.mulf %171, %168 : vector<8x128xf32>
    %cst_60 = arith.constant 4.471500e-02 : f32
    %173 = vector.broadcast %cst_60 : f32 to vector<8x128xf32>
    %174 = arith.mulf %173, %172 : vector<8x128xf32>
    %175 = arith.addf %168, %174 : vector<8x128xf32>
    %cst_61 = arith.constant 0.797884583 : f32
    %176 = vector.broadcast %cst_61 : f32 to vector<8x128xf32>
    %177 = arith.mulf %176, %175 : vector<8x128xf32>
    %178 = math.tanh %177 : vector<8x128xf32>
    %cst_62 = arith.constant 1.000000e+00 : f32
    %179 = vector.broadcast %cst_62 : f32 to vector<8x128xf32>
    %180 = arith.addf %179, %178 : vector<8x128xf32>
    %181 = arith.mulf %170, %180 : vector<8x128xf32>
    %182 = arith.truncf %181 : vector<8x128xf32> to vector<8x128xbf16>
    %c0_63 = arith.constant 0 : index
    %c0_64 = arith.constant 0 : index
    %183 = vector.load %arg13[%c0_63, %c0_64] : memref<128x32xbf16, #tpu.memory_space<vmem>>, vector<128x32xbf16>
    %cst_65 = arith.constant dense<0.000000e+00> : vector<8x32xf32>
    %184 = tpu.matmul %182, %183, %cst_65 {dimension_numbers = #tpu.dot_dimension_numbers<[1], [0], [0], [1], [0, 0, 1, 1], [], []>} : vector<8x128xbf16>, vector<128x32xbf16>, vector<8x32xf32> -> vector<8x32xf32>
    %c0_66 = arith.constant 0 : index
    %c0_67 = arith.constant 0 : index
    %185 = vector.load %arg14[%c0_66, %c0_67] : memref<1x32xf32, #tpu.memory_space<vmem>>, vector<1x32xf32>
    %186 = vector.broadcast %185 : vector<1x32xf32> to vector<8x32xf32>
    %187 = arith.addf %184, %186 : vector<8x32xf32>
    %188 = arith.addf %138, %187 : vector<8x32xf32>
    %c0_68 = arith.constant 0 : index
    %c0_69 = arith.constant 0 : index
    %c0_70 = arith.constant 0 : index
    %189 = vector.load %arg15[%c0_68, %c0_69, %c0_70] : memref<1x8x32xf32, #tpu.memory_space<vmem>>, vector<1x8x32xf32>
    %190 = vector.shape_cast %189 : vector<1x8x32xf32> to vector<8x32xf32>
    %191 = vector.shape_cast %188 : vector<8x32xf32> to vector<1x8x32xf32>
    tpu.vector_store %arg15[%c0_68, %c0_69, %c0_70], %191 {strides = array<i32>} : memref<1x8x32xf32, #tpu.memory_space<vmem>>, vector<1x8x32xf32>,
    return
  }
  func.func @transform_0(%arg0: i32, %arg1: i32) -> (i32, i32, i32) {
    %c0_i32 = arith.constant 0 : i32
    %c0_i32_0 = arith.constant 0 : i32
    %c0_i32_1 = arith.constant 0 : i32
    return %arg0, %c0_i32, %c0_i32_0 : i32, i32, i32
  }
  func.func @transform_1(%arg0: i32, %arg1: i32) -> (i32, i32) {
    %c0_i32 = arith.constant 0 : i32
    %c0_i32_0 = arith.constant 0 : i32
    %c0_i32_1 = arith.constant 0 : i32
    return %c0_i32, %c0_i32_0 : i32, i32
  }
  func.func @transform_2(%arg0: i32, %arg1: i32) -> (i32, i32) {
    %c0_i32 = arith.constant 0 : i32
    %c0_i32_0 = arith.constant 0 : i32
    %c0_i32_1 = arith.constant 0 : i32
    return %c0_i32, %c0_i32_0 : i32, i32
  }
  func.func @transform_3(%arg0: i32, %arg1: i32) -> (i32, i32) {
    %c0_i32 = arith.constant 0 : i32
    %c0_i32_0 = arith.constant 0 : i32
    %c0_i32_1 = arith.constant 0 : i32
    return %c0_i32, %c0_i32_0 : i32, i32
  }
  func.func @transform_4(%arg0: i32, %arg1: i32) -> (i32, i32) {
    %c0_i32 = arith.constant 0 : i32
    %c0_i32_0 = arith.constant 0 : i32
    %c0_i32_1 = arith.constant 0 : i32
    return %c0_i32, %c0_i32_0 : i32, i32
  }
  func.func @transform_5(%arg0: i32, %arg1: i32) -> (i32, i32) {
    %c0_i32 = arith.constant 0 : i32
    %c0_i32_0 = arith.constant 0 : i32
    %c0_i32_1 = arith.constant 0 : i32
    return %c0_i32, %c0_i32_0 : i32, i32
  }
  func.func @transform_6(%arg0: i32, %arg1: i32) -> (i32, i32) {
    %c0_i32 = arith.constant 0 : i32
    %c0_i32_0 = arith.constant 0 : i32
    %c0_i32_1 = arith.constant 0 : i32
    return %c0_i32, %c0_i32_0 : i32, i32
  }
  func.func @transform_7(%arg0: i32, %arg1: i32) -> (i32, i32) {
    %c0_i32 = arith.constant 0 : i32
    %c0_i32_0 = arith.constant 0 : i32
    %c0_i32_1 = arith.constant 0 : i32
    return %c0_i32, %c0_i32_0 : i32, i32
  }
  func.func @transform_8(%arg0: i32, %arg1: i32) -> (i32, i32) {
    %c0_i32 = arith.constant 0 : i32
    %c0_i32_0 = arith.constant 0 : i32
    %c0_i32_1 = arith.constant 0 : i32
    return %c0_i32, %c0_i32_0 : i32, i32
  }
  func.func @transform_9(%arg0: i32, %arg1: i32) -> (i32, i32) {
    %c0_i32 = arith.constant 0 : i32
    %c0_i32_0 = arith.constant 0 : i32
    %c0_i32_1 = arith.constant 0 : i32
    return %c0_i32, %c0_i32_0 : i32, i32
  }
  func.func @transform_10(%arg0: i32, %arg1: i32) -> (i32, i32) {
    %c0_i32 = arith.constant 0 : i32
    %c0_i32_0 = arith.constant 0 : i32
    %c0_i32_1 = arith.constant 0 : i32
    return %c0_i32, %c0_i32_0 : i32, i32
  }
  func.func @transform_11(%arg0: i32, %arg1: i32) -> (i32, i32) {
    %c0_i32 = arith.constant 0 : i32
    %c0_i32_0 = arith.constant 0 : i32
    %c0_i32_1 = arith.constant 0 : i32
    return %c0_i32, %c0_i32_0 : i32, i32
  }
  func.func @transform_12(%arg0: i32, %arg1: i32) -> (i32, i32) {
    %c0_i32 = arith.constant 0 : i32
    %c0_i32_0 = arith.constant 0 : i32
    %c0_i32_1 = arith.constant 0 : i32
    return %c0_i32, %c0_i32_0 : i32, i32
  }
  func.func @transform_13(%arg0: i32, %arg1: i32) -> (i32, i32, i32) {
    %c0_i32 = arith.constant 0 : i32
    %c0_i32_0 = arith.constant 0 : i32
    return %arg0, %arg1, %c0_i32 : i32, i32, i32
  }
}

</mosaic_0001>

<llo_original>
// kernel: tpu_custom_call.1
$region0: #{tpu_custom_call.1}
  #allocation0 [shape = 'u32[]', space=smem, size = 0x4, offset = 0x4, fixed_abs, tag = 'smem constant byte address 0x4 - core index']
  #allocation1 [shape = 'u32[144,128]{1,0:T(1,128)}', space=vmem, size = 0x12000, scoped, tag = 'internal scratch']
  %s0 = inlined_call_operand.vmem [shape: f32[2,8,32], index: 0, kind: input, shape index: {}]
  %s1 = inlined_call_operand.vmem [shape: f32[1,32], index: 1, kind: input, shape index: {}]
  %s2 = inlined_call_operand.vmem [shape: f32[1,32], index: 2, kind: input, shape index: {}]
  %s3 = inlined_call_operand.vmem [shape: bf16[32,96], index: 3, kind: input, shape index: {}]
  %s4 = inlined_call_operand.vmem [shape: f32[1,96], index: 4, kind: input, shape index: {}]
  %s5 = inlined_call_operand.vmem [shape: bf16[32,32], index: 5, kind: input, shape index: {}]
  %s6 = inlined_call_operand.vmem [shape: f32[1,32], index: 6, kind: input, shape index: {}]
  %s7 = inlined_call_operand.vmem [shape: f32[1,32], index: 7, kind: input, shape index: {}]
  %s8 = inlined_call_operand.vmem [shape: f32[1,32], index: 8, kind: input, shape index: {}]
  %s9 = inlined_call_operand.vmem [shape: bf16[32,128], index: 9, kind: input, shape index: {}]
  %s10 = inlined_call_operand.vmem [shape: f32[1,128], index: 10, kind: input, shape index: {}]
  %s11 = inlined_call_operand.vmem [shape: bf16[128,32], index: 11, kind: input, shape index: {}]
  %s12 = inlined_call_operand.vmem [shape: f32[1,32], index: 12, kind: input, shape index: {}]
  %s13 = inlined_call_operand.hbm [shape: f32[2,8,32], index: 13, kind: output, shape index: {}]
  %s14 = sld [smem:[#allocation0]]
  $region85: #{tpu_custom_call.1} parent=0
    _
  %s16 = ssub.s32 1, %s14
  %s17 = scalar_select 0, %s16, %s14
  $region1: #{tpu_custom_call.1} parent=0
    #allocation2 [shape = 'u8[8192]{0}', space=vmem, size = 0x2000, scoped, tag = 'output window, operand 0']
    #allocation3 [shape = 's32[2]{0}', space=sflag, size = 0x8, scoped, tag = 'scoped memory for tpu_custom_call.1']
    %18 = vsyncpa [#allocation3], 0
    %s19 = scalar_lea.sflag [#allocation3], 1
    %20 = vsyncpa %s19, 0
    loop: start=0, step=1, limit=4
    $region2: #{tpu_custom_call.1} parent=1 // loop_pre_header
      _
    $region3: #{tpu_custom_call.1} parent=1 // loop_header
      %s22 = sphi 0, %s26
      %p23 = scmp.ge.s32.totalorder %s22, 4
      %s29 = sphi 0, %s41
      %s30 = sphi 0, %s37
      %s31 = sphi 0, %s29
      %s32 = sphi 0, %s30
      %s33 = sphi 0, %s31
      %s34 = sphi 0, %s32
      %s44 = sphi 0, %s46
      %s47 = sphi 0, %s44
      %s48 = sphi 0, %s47
      %s64 = sphi 0, %s48
      %s68 = sphi 0, %s68
      %s70 = sphi 0, %s68
      %s71 = sphi 0, %s70
      %s85 = sphi 0, %s71
      %s89 = sphi 0, %s89
      %s91 = sphi 0, %s89
      %s92 = sphi 0, %s91
      %s106 = sphi 0, %s92
      %s110 = sphi 0, %s110
      %s112 = sphi 0, %s110
      %s113 = sphi 0, %s112
      %s127 = sphi 0, %s113
      %s131 = sphi 0, %s131
      %s133 = sphi 0, %s131
      %s134 = sphi 0, %s133
      %s148 = sphi 0, %s134
      %s152 = sphi 0, %s152
      %s154 = sphi 0, %s152
      %s155 = sphi 0, %s154
      %s169 = sphi 0, %s155
      %s173 = sphi 0, %s173
      %s175 = sphi 0, %s173
      %s176 = sphi 0, %s175
      %s190 = sphi 0, %s176
      %s194 = sphi 0, %s194
      %s196 = sphi 0, %s194
      %s197 = sphi 0, %s196
      %s211 = sphi 0, %s197
      %s215 = sphi 0, %s215
      %s217 = sphi 0, %s215
      %s218 = sphi 0, %s217
      %s232 = sphi 0, %s218
      %s236 = sphi 0, %s236
      %s238 = sphi 0, %s236
      %s239 = sphi 0, %s238
      %s253 = sphi 0, %s239
      %s257 = sphi 0, %s257
      %s259 = sphi 0, %s257
      %s260 = sphi 0, %s259
      %s274 = sphi 0, %s260
      %s278 = sphi 0, %s278
      %s280 = sphi 0, %s278
      %s281 = sphi 0, %s280
      %s295 = sphi 0, %s281
      %s299 = sphi 0, %s299
      %s301 = sphi 0, %s299
      %s302 = sphi 0, %s301
      %s316 = sphi 0, %s302
      %s324 = sphi 0, %s326
      %s327 = sphi 0, %s324
      %s328 = sphi 0, %s327
      %s344 = sphi 0, %s328
    $region4: #{tpu_custom_call.1} parent=1 // loop_header_branch
      %25 = sbr.rel (%p23) target = $region8
    $region5: #{tpu_custom_call.1} parent=1 // loop_body
      %s27 = ssub.s32 %s22, 1
      %s28 = ssub.s32 %s22, 2
      %s35 = sadd.s32 1, %s30
      %p36 = scmp.ge.s32.totalorder %s35, 1
      %s37 = scalar_select %p36, 0, %s35
      %s38 = sadd.s32 1, %s29
      %s39 = scalar_select %p36, %s38, %s29
      %p40 = scmp.ge.s32.totalorder %s39, 2
      %s41 = scalar_select %p40, 0, %s39
      %s42 = ssub.s32 %s29, %s41
      %p43 = scmp.eq.s32.totalorder %s42, 0
      %s45 = sadd.s32 %s44, 1
      %s46 = scalar_select %p43, %s44, %s45
      %p49 = pneg %p43
      %p50 = scmp.eq.s32.totalorder %s22, 1
      %p51 = por %p49, %p50
      %p52 = scmp.ne.s32.totalorder %s44, %s47
      %p53 = scmp.eq.s32.totalorder %s22, 0
      %p54 = por %p52, %p53
      %p55 = scmp.ne.s32.totalorder %s44, %s47
      %p56 = scmp.eq.s32.totalorder %s27, 1
      %p57 = por %p55, %p56
      %p58 = scmp.ne.s32.totalorder %s47, %s48
      %p59 = scmp.eq.s32.totalorder %s27, 0
      %p60 = por %p58, %p59
      %p61 = scmp.ne.s32.totalorder %s47, %s48
      %p62 = scmp.eq.s32.totalorder %s28, 1
      %p63 = por %p61, %p62
      %p65 = scmp.ne.s32.totalorder %s48, %s64
      %p66 = scmp.eq.s32.totalorder %s28, 0
      %p67 = por %p65, %p66
      %s69 = sadd.s32 %s68, 1
      %p72 = scmp.eq.s32.totalorder %s22, 1
      %p73 = scmp.ne.s32.totalorder %s68, %s70
      %p74 = scmp.eq.s32.totalorder %s22, 0
      %p75 = por %p73, %p74
      %p76 = scmp.ne.s32.totalorder %s68, %s70
      %p77 = scmp.eq.s32.totalorder %s27, 1
      %p78 = por %p76, %p77
      %p79 = scmp.ne.s32.totalorder %s70, %s71
      %p80 = scmp.eq.s32.totalorder %s27, 0
      %p81 = por %p79, %p80
      %p82 = scmp.ne.s32.totalorder %s70, %s71
      %p83 = scmp.eq.s32.totalorder %s28, 1
      %p84 = por %p82, %p83
      %p86 = scmp.ne.s32.totalorder %s71, %s85
      %p87 = scmp.eq.s32.totalorder %s28, 0
      %p88 = por %p86, %p87
      %s90 = sadd.s32 %s89, 1
      %p93 = scmp.eq.s32.totalorder %s22, 1
      %p94 = scmp.ne.s32.totalorder %s89, %s91
      %p95 = scmp.eq.s32.totalorder %s22, 0
      %p96 = por %p94, %p95
      %p97 = scmp.ne.s32.totalorder %s89, %s91
      %p98 = scmp.eq.s32.totalorder %s27, 1
      %p99 = por %p97, %p98
      %p100 = scmp.ne.s32.totalorder %s91, %s92
      %p101 = scmp.eq.s32.totalorder %s27, 0
      %p102 = por %p100, %p101
      %p103 = scmp.ne.s32.totalorder %s91, %s92
      %p104 = scmp.eq.s32.totalorder %s28, 1
      %p105 = por %p103, %p104
      %p107 = scmp.ne.s32.totalorder %s92, %s106
      %p108 = scmp.eq.s32.totalorder %s28, 0
      %p109 = por %p107, %p108
      %s111 = sadd.s32 %s110, 1
      %p114 = scmp.eq.s32.totalorder %s22, 1
      %p115 = scmp.ne.s32.totalorder %s110, %s112
      %p116 = scmp.eq.s32.totalorder %s22, 0
      %p117 = por %p115, %p116
      %p118 = scmp.ne.s32.totalorder %s110, %s112
      %p119 = scmp.eq.s32.totalorder %s27, 1
      %p120 = por %p118, %p119
      %p121 = scmp.ne.s32.totalorder %s112, %s113
      %p122 = scmp.eq.s32.totalorder %s27, 0
      %p123 = por %p121, %p122
      %p124 = scmp.ne.s32.totalorder %s112, %s113
      %p125 = scmp.eq.s32.totalorder %s28, 1
      %p126 = por %p124, %p125
      %p128 = scmp.ne.s32.totalorder %s113, %s127
      %p129 = scmp.eq.s32.totalorder %s28, 0
      %p130 = por %p128, %p129
      %s132 = sadd.s32 %s131, 1
      %p135 = scmp.eq.s32.totalorder %s22, 1
      %p136 = scmp.ne.s32.totalorder %s131, %s133
      %p137 = scmp.eq.s32.totalorder %s22, 0
      %p138 = por %p136, %p137
      %p139 = scmp.ne.s32.totalorder %s131, %s133
      %p140 = scmp.eq.s32.totalorder %s27, 1
      %p141 = por %p139, %p140
      %p142 = scmp.ne.s32.totalorder %s133, %s134
      %p143 = scmp.eq.s32.totalorder %s27, 0
      %p144 = por %p142, %p143
      %p145 = scmp.ne.s32.totalorder %s133, %s134
      %p146 = scmp.eq.s32.totalorder %s28, 1
      %p147 = por %p145, %p146
      %p149 = scmp.ne.s32.totalorder %s134, %s148
      %p150 = scmp.eq.s32.totalorder %s28, 0
      %p151 = por %p149, %p150
      %s153 = sadd.s32 %s152, 1
      %p156 = scmp.eq.s32.totalorder %s22, 1
      %p157 = scmp.ne.s32.totalorder %s152, %s154
      %p158 = scmp.eq.s32.totalorder %s22, 0
      %p159 = por %p157, %p158
      %p160 = scmp.ne.s32.totalorder %s152, %s154
      %p161 = scmp.eq.s32.totalorder %s27, 1
      %p162 = por %p160, %p161
      %p163 = scmp.ne.s32.totalorder %s154, %s155
      %p164 = scmp.eq.s32.totalorder %s27, 0
      %p165 = por %p163, %p164
      %p166 = scmp.ne.s32.totalorder %s154, %s155
      %p167 = scmp.eq.s32.totalorder %s28, 1
      %p168 = por %p166, %p167
      %p170 = scmp.ne.s32.totalorder %s155, %s169
      %p171 = scmp.eq.s32.totalorder %s28, 0
      %p172 = por %p170, %p171
      %s174 = sadd.s32 %s173, 1
      %p177 = scmp.eq.s32.totalorder %s22, 1
      %p178 = scmp.ne.s32.totalorder %s173, %s175
      %p179 = scmp.eq.s32.totalorder %s22, 0
      %p180 = por %p178, %p179
      %p181 = scmp.ne.s32.totalorder %s173, %s175
      %p182 = scmp.eq.s32.totalorder %s27, 1
      %p183 = por %p181, %p182
      %p184 = scmp.ne.s32.totalorder %s175, %s176
      %p185 = scmp.eq.s32.totalorder %s27, 0
      %p186 = por %p184, %p185
      %p187 = scmp.ne.s32.totalorder %s175, %s176
      %p188 = scmp.eq.s32.totalorder %s28, 1
      %p189 = por %p187, %p188
      %p191 = scmp.ne.s32.totalorder %s176, %s190
      %p192 = scmp.eq.s32.totalorder %s28, 0
      %p193 = por %p191, %p192
      %s195 = sadd.s32 %s194, 1
      %p198 = scmp.eq.s32.totalorder %s22, 1
      %p199 = scmp.ne.s32.totalorder %s194, %s196
      %p200 = scmp.eq.s32.totalorder %s22, 0
      %p201 = por %p199, %p200
      %p202 = scmp.ne.s32.totalorder %s194, %s196
      %p203 = scmp.eq.s32.totalorder %s27, 1
      %p204 = por %p202, %p203
      %p205 = scmp.ne.s32.totalorder %s196, %s197
      %p206 = scmp.eq.s32.totalorder %s27, 0
      %p207 = por %p205, %p206
      %p208 = scmp.ne.s32.totalorder %s196, %s197
      %p209 = scmp.eq.s32.totalorder %s28, 1
      %p210 = por %p208, %p209
      %p212 = scmp.ne.s32.totalorder %s197, %s211
      %p213 = scmp.eq.s32.totalorder %s28, 0
      %p214 = por %p212, %p213
      %s216 = sadd.s32 %s215, 1
      %p219 = scmp.eq.s32.totalorder %s22, 1
      %p220 = scmp.ne.s32.totalorder %s215, %s217
      %p221 = scmp.eq.s32.totalorder %s22, 0
      %p222 = por %p220, %p221
      %p223 = scmp.ne.s32.totalorder %s215, %s217
      %p224 = scmp.eq.s32.totalorder %s27, 1
      %p225 = por %p223, %p224
      %p226 = scmp.ne.s32.totalorder %s217, %s218
      %p227 = scmp.eq.s32.totalorder %s27, 0
      %p228 = por %p226, %p227
      %p229 = scmp.ne.s32.totalorder %s217, %s218
      %p230 = scmp.eq.s32.totalorder %s28, 1
      %p231 = por %p229, %p230
      %p233 = scmp.ne.s32.totalorder %s218, %s232
      %p234 = scmp.eq.s32.totalorder %s28, 0
      %p235 = por %p233, %p234
      %s237 = sadd.s32 %s236, 1
      %p240 = scmp.eq.s32.totalorder %s22, 1
      %p241 = scmp.ne.s32.totalorder %s236, %s238
      %p242 = scmp.eq.s32.totalorder %s22, 0
      %p243 = por %p241, %p242
      %p244 = scmp.ne.s32.totalorder %s236, %s238
      %p245 = scmp.eq.s32.totalorder %s27, 1
      %p246 = por %p244, %p245
      %p247 = scmp.ne.s32.totalorder %s238, %s239
      %p248 = scmp.eq.s32.totalorder %s27, 0
      %p249 = por %p247, %p248
      %p250 = scmp.ne.s32.totalorder %s238, %s239
      %p251 = scmp.eq.s32.totalorder %s28, 1
      %p252 = por %p250, %p251
      %p254 = scmp.ne.s32.totalorder %s239, %s253
      %p255 = scmp.eq.s32.totalorder %s28, 0
      %p256 = por %p254, %p255
      %s258 = sadd.s32 %s257, 1
      %p261 = scmp.eq.s32.totalorder %s22, 1
      %p262 = scmp.ne.s32.totalorder %s257, %s259
      %p263 = scmp.eq.s32.totalorder %s22, 0
      %p264 = por %p262, %p263
      %p265 = scmp.ne.s32.totalorder %s257, %s259
      %p266 = scmp.eq.s32.totalorder %s27, 1
      %p267 = por %p265, %p266
      %p268 = scmp.ne.s32.totalorder %s259, %s260
      %p269 = scmp.eq.s32.totalorder %s27, 0
      %p270 = por %p268, %p269
      %p271 = scmp.ne.s32.totalorder %s259, %s260
      %p272 = scmp.eq.s32.totalorder %s28, 1
      %p273 = por %p271, %p272
      %p275 = scmp.ne.s32.totalorder %s260, %s274
      %p276 = scmp.eq.s32.totalorder %s28, 0
      %p277 = por %p275, %p276
      %s279 = sadd.s32 %s278, 1
      %p282 = scmp.eq.s32.totalorder %s22, 1
      %p283 = scmp.ne.s32.totalorder %s278, %s280
      %p284 = scmp.eq.s32.totalorder %s22, 0
      %p285 = por %p283, %p284
      %p286 = scmp.ne.s32.totalorder %s278, %s280
      %p287 = scmp.eq.s32.totalorder %s27, 1
      %p288 = por %p286, %p287
      %p289 = scmp.ne.s32.totalorder %s280, %s281
      %p290 = scmp.eq.s32.totalorder %s27, 0
      %p291 = por %p289, %p290
      %p292 = scmp.ne.s32.totalorder %s280, %s281
      %p293 = scmp.eq.s32.totalorder %s28, 1
      %p294 = por %p292, %p293
      %p296 = scmp.ne.s32.totalorder %s281, %s295
      %p297 = scmp.eq.s32.totalorder %s28, 0
      %p298 = por %p296, %p297
      %s300 = sadd.s32 %s299, 1
      %p303 = scmp.eq.s32.totalorder %s22, 1
      %p304 = scmp.ne.s32.totalorder %s299, %s301
      %p305 = scmp.eq.s32.totalorder %s22, 0
      %p306 = por %p304, %p305
      %p307 = scmp.ne.s32.totalorder %s299, %s301
      %p308 = scmp.eq.s32.totalorder %s27, 1
      %p309 = por %p307, %p308
      %p310 = scmp.ne.s32.totalorder %s301, %s302
      %p311 = scmp.eq.s32.totalorder %s27, 0
      %p312 = por %p310, %p311
      %p313 = scmp.ne.s32.totalorder %s301, %s302
      %p314 = scmp.eq.s32.totalorder %s28, 1
      %p315 = por %p313, %p314
      %p317 = scmp.ne.s32.totalorder %s302, %s316
      %p318 = scmp.eq.s32.totalorder %s28, 0
      %p319 = por %p317, %p318
      %s320 = ssub.s32 %s29, %s41
      %s321 = ssub.s32 %s30, %s37
      %s322 = sor.u32 %s320, %s321
      %p323 = scmp.eq.s32.totalorder %s322, 0
      %s325 = sadd.s32 %s324, 1
      %s326 = scalar_select %p323, %s324, %s325
      %p329 = pneg %p323
      %p330 = scmp.eq.s32.totalorder %s22, 1
      %p331 = por %p329, %p330
      %p332 = scmp.ne.s32.totalorder %s324, %s327
      %p333 = scmp.eq.s32.totalorder %s22, 0
      %p334 = por %p332, %p333
      %p335 = scmp.ne.s32.totalorder %s324, %s327
      %p336 = scmp.eq.s32.totalorder %s27, 1
      %p337 = por %p335, %p336
      %p338 = scmp.ne.s32.totalorder %s327, %s328
      %p339 = scmp.eq.s32.totalorder %s27, 0
      %p340 = por %p338, %p339
      %p341 = scmp.ne.s32.totalorder %s327, %s328
      %p342 = scmp.eq.s32.totalorder %s28, 1
      %p343 = por %p341, %p342
      %p345 = scmp.ne.s32.totalorder %s328, %s344
      %p346 = scmp.eq.s32.totalorder %s28, 0
      %p347 = por %p345, %p346
      %p348 = scmp.le.s32.totalorder 1, %s22
      %p349 = scmp.lt.s32.totalorder %s22, 3
      %p350 = pnand %p348, %p349
      %p351 = pneg %p350
      // Predicated region
      $region9: #{tpu_custom_call.1} parent=5 // pred_check
        _
      $region10: #{tpu_custom_call.1} parent=5 // pred_check_branch
        %353 = sbr.rel (%p350) target = $region12
      $region11: #{tpu_custom_call.1} parent=5 // pred_region
        %s354 = ssub.s32 %s22, 1
        // Predicated region
        $region13: #{tpu_custom_call.1} parent=11 // pred_check
          %p355 = pneg %p81
        $region14: #{tpu_custom_call.1} parent=11 // pred_check_branch
          %357 = sbr.rel (%p355) target = $region16
        $region15: #{tpu_custom_call.1} parent=11 // pred_region
          _
        $region16: #{tpu_custom_call.1} parent=11 // pred_fallthru
          _
        // Predicated region
        $region17: #{tpu_custom_call.1} parent=11 // pred_check
          %p358 = pneg %p102
        $region18: #{tpu_custom_call.1} parent=11 // pred_check_branch
          %360 = sbr.rel (%p358) target = $region20
        $region19: #{tpu_custom_call.1} parent=11 // pred_region
          _
        $region20: #{tpu_custom_call.1} parent=11 // pred_fallthru
          _
        // Predicated region
        $region21: #{tpu_custom_call.1} parent=11 // pred_check
          %p361 = pneg %p123
        $region22: #{tpu_custom_call.1} parent=11 // pred_check_branch
          %363 = sbr.rel (%p361) target = $region24
        $region23: #{tpu_custom_call.1} parent=11 // pred_region
          _
        $region24: #{tpu_custom_call.1} parent=11 // pred_fallthru
          _
        // Predicated region
        $region25: #{tpu_custom_call.1} parent=11 // pred_check
          %p364 = pneg %p144
        $region26: #{tpu_custom_call.1} parent=11 // pred_check_branch
          %366 = sbr.rel (%p364) target = $region28
        $region27: #{tpu_custom_call.1} parent=11 // pred_region
          _
        $region28: #{tpu_custom_call.1} parent=11 // pred_fallthru
          _
        // Predicated region
        $region29: #{tpu_custom_call.1} parent=11 // pred_check
          %p367 = pneg %p165
        $region30: #{tpu_custom_call.1} parent=11 // pred_check_branch
          %369 = sbr.rel (%p367) target = $region32
        $region31: #{tpu_custom_call.1} parent=11 // pred_region
          _
        $region32: #{tpu_custom_call.1} parent=11 // pred_fallthru
          _
        // Predicated region
        $region33: #{tpu_custom_call.1} parent=11 // pred_check
          %p370 = pneg %p186
        $region34: #{tpu_custom_call.1} parent=11 // pred_check_branch
          %372 = sbr.rel (%p370) target = $region36
        $region35: #{tpu_custom_call.1} parent=11 // pred_region
          _
        $region36: #{tpu_custom_call.1} parent=11 // pred_fallthru
          _
        // Predicated region
        $region37: #{tpu_custom_call.1} parent=11 // pred_check
          %p373 = pneg %p207
        $region38: #{tpu_custom_call.1} parent=11 // pred_check_branch
          %375 = sbr.rel (%p373) target = $region40
        $region39: #{tpu_custom_call.1} parent=11 // pred_region
          _
        $region40: #{tpu_custom_call.1} parent=11 // pred_fallthru
          _
        // Predicated region
        $region41: #{tpu_custom_call.1} parent=11 // pred_check
          %p376 = pneg %p228
        $region42: #{tpu_custom_call.1} parent=11 // pred_check_branch
          %378 = sbr.rel (%p376) target = $region44
        $region43: #{tpu_custom_call.1} parent=11 // pred_region
          _
        $region44: #{tpu_custom_call.1} parent=11 // pred_fallthru
          _
        // Predicated region
        $region45: #{tpu_custom_call.1} parent=11 // pred_check
          %p379 = pneg %p249
        $region46: #{tpu_custom_call.1} parent=11 // pred_check_branch
          %381 = sbr.rel (%p379) target = $region48
        $region47: #{tpu_custom_call.1} parent=11 // pred_region
          _
        $region48: #{tpu_custom_call.1} parent=11 // pred_fallthru
          _
        // Predicated region
        $region49: #{tpu_custom_call.1} parent=11 // pred_check
          %p382 = pneg %p270
        $region50: #{tpu_custom_call.1} parent=11 // pred_check_branch
          %384 = sbr.rel (%p382) target = $region52
        $region51: #{tpu_custom_call.1} parent=11 // pred_region
          _
        $region52: #{tpu_custom_call.1} parent=11 // pred_fallthru
          _
        // Predicated region
        $region53: #{tpu_custom_call.1} parent=11 // pred_check
          %p385 = pneg %p291
        $region54: #{tpu_custom_call.1} parent=11 // pred_check_branch
          %387 = sbr.rel (%p385) target = $region56
        $region55: #{tpu_custom_call.1} parent=11 // pred_region
          _
        $region56: #{tpu_custom_call.1} parent=11 // pred_fallthru
          _
        // Predicated region
        $region57: #{tpu_custom_call.1} parent=11 // pred_check
          %p388 = pneg %p312
        $region58: #{tpu_custom_call.1} parent=11 // pred_check_branch
          %390 = sbr.rel (%p388) target = $region60
        $region59: #{tpu_custom_call.1} parent=11 // pred_region
          _
        $region60: #{tpu_custom_call.1} parent=11 // pred_fallthru
          _
      $region12: #{tpu_custom_call.1} parent=5 // pred_fallthru
        _
      %p391 = scmp.lt.s32.totalorder %s22, 2
      // Predicated region
      $region61: #{tpu_custom_call.1} parent=5 // pred_check
        %p392 = pneg %p391
      $region62: #{tpu_custom_call.1} parent=5 // pred_check_branch
        %394 = sbr.rel (%p392) target = $region64
      $region63: #{tpu_custom_call.1} parent=5 // pred_region
        // Predicated region
        $region65: #{tpu_custom_call.1} parent=63 // pred_check
          %p395 = pneg %p54
        $region66: #{tpu_custom_call.1} parent=63 // pred_check_branch
          %397 = sbr.rel (%p395) target = $region68
        $region67: #{tpu_custom_call.1} parent=63 // pred_region
          %p398 = scmp.lt.s32.totalorder %s29, 1
          %s399 = scalar_select %p398, %s29, 1
          %s400 = smul.addr %s399, 8
          %s401 = scalar_lea.vmem %s0, %s400
        $region68: #{tpu_custom_call.1} parent=63 // pred_fallthru
          _
      $region64: #{tpu_custom_call.1} parent=5 // pred_fallthru
        _
      %p402 = scmp.le.s32.totalorder 1, %s22
      %p403 = scmp.lt.s32.totalorder %s22, 3
      %p404 = pnand %p402, %p403
      %p405 = pneg %p404
      // Predicated region
      $region69: #{tpu_custom_call.1} parent=5 // pred_check
        _
      $region70: #{tpu_custom_call.1} parent=5 // pred_check_branch
        %407 = sbr.rel (%p404) target = $region72
      $region71: #{tpu_custom_call.1} parent=5 // pred_region
        %s408 = ssub.s32 %s22, 1
        %p409 = scmp.lt.s32.totalorder %s31, 1
        %s410 = scalar_select %p409, %s31, 1
        %s411 = smul.addr %s410, 8
        %s412 = scalar_lea.vmem %s0, %s411
        %p413 = pneg %p60
        %p414 = pneg %p57
        %p415 = pneg %p81
        %p416 = pneg %p78
        %p417 = pneg %p102
        %p418 = pneg %p99
        %p419 = pneg %p123
        %p420 = pneg %p120
        %p421 = pneg %p144
        %p422 = pneg %p141
        %p423 = pneg %p165
        %p424 = pneg %p162
        %p425 = pneg %p186
        %p426 = pneg %p183
        %p427 = pneg %p207
        %p428 = pneg %p204
        %p429 = pneg %p228
        %p430 = pneg %p225
        %p431 = pneg %p249
        %p432 = pneg %p246
        %p433 = pneg %p270
        %p434 = pneg %p267
        %p435 = pneg %p291
        %p436 = pneg %p288
        %p437 = pneg %p312
        %p438 = pneg %p309
        %p439 = pneg %p340
        %p440 = pneg %p337
        %s441 = sand.u32 %s327, 1
        %s442 = scalar_lea.sflag [#allocation3], %s441
        %s443 = sand.u32 %s327, 1
        %s444 = smul.addr %s443, 8
        %s445 = scalar_lea.vmem [#allocation2], %s444
        %p446 = scmp.lt.s32.totalorder %s31, 1
        %s447 = scalar_select %p446, %s31, 1
        %s448 = smul.addr %s447, 8
        %s449 = scalar_lea.vmem %s0, %s448
        %v451 = vld [vmem:[%s449] sm:$0xff]
        %v452 = vld [vmem:[%s1] sm:$0x1]
        %v453 = vld [vmem:[%s2] sm:$0x1]
        %vm454 = vcmask 261120
        %v455 = vsel %vm454, %v451, 0.0
        %456 = vadd.xlane.f32.xlu0 %v455
        %v457 = vpop.xlane.xlu0 %456
        %v458 = vrcp.pop 32.0
        %v459 = vmul.f32 %v457, %v458
        %v460 = vsub.f32 %v451, %v459
        %v461 = vmul.f32 %v460, %v460
        %v462 = vsel %vm454, %v461, 0.0
        %463 = vadd.xlane.f32.xlu0 %v462
        %v464 = vpop.xlane.xlu0 %463
        %v465 = vmul.f32 %v464, %v458
        %v466 = vadd.f32 %v465, 1e-06
        %v467 = vrsqrt.pop %v466
        %v468 = vmul.f32 %v460, %v467
        %v470 = vlaneseq
        %v471 = vshrl.u32 %v470, 7
        %v472 = vsub.s32 0, %v471
        %v473 = vrot.slane %v452, %v472
        %v475 = vmul.f32 %v468, %v473
        %v477 = vlaneseq
        %v478 = vshrl.u32 %v477, 7
        %v479 = vsub.s32 0, %v478
        %v480 = vrot.slane %v453, %v479
        %v482 = vadd.f32 %v475, %v480
        %v483 = vld [vmem:[%s3] sm:$0xf]
        %v484 = vld [vmem:[%s3 + $0x4] sm:$0xf]
        %v485 = vld [vmem:[%s3 + $0x8] sm:$0xf]
        %v486 = vld [vmem:[%s3 + $0xc] sm:$0xf]
        %v487 = vld [vmem:[%s4] sm:$0x1]
        %v488 = vpack.c.bf16 %v482, %v482
        %v490 = vlaneseq
        %v491 = vshrl.u32 %v490, 7
        %v492 = vsub.s32 0, %v491
        %v493 = vrot.slane %v487, %v492
        %v499 = vunpack.c.l.b16 %v483
        %v500 = vunpack.c.l.b16 %v484
        %v501 = vunpack.c.l.b16 %v485
        %v502 = vunpack.c.l.b16 %v486
        %v503 = vpack.c.b16 %v500, %v499
        %v504 = vpack.c.b16 %v502, %v501
        %v508 = vsel %vm454, %v488, 0
        %510 = vmatprep.subr.bf16.mxu0 0
        %511 = vmatpush1.bf16.msra.mxu0 %v503
        %512 = vmatprep.subr.bf16.mxu0 0
        %513 = vmatpush1.bf16.msra.mxu0 %v504
        %514 = vmatprep.subr.bf16.mxu0 0
        %515 = vmatpush1.bf16.msra.mxu0 0
        %516 = vmatprep.subr.bf16.mxu0 0
        %517 = vmatpush1.bf16.msra.mxu0 0
        %518 = vmatprep.subr.bf16.mxu0 0
        %519 = vmatpush1.bf16.msra.mxu0 0
        %520 = vmatprep.subr.bf16.mxu0 0
        %521 = vmatpush1.bf16.msra.mxu0 0
        %522 = vmatprep.subr.bf16.mxu0 0
        %523 = vmatpush1.bf16.msra.mxu0 0
        %524 = vmatprep.subr.bf16.mxu0 0
        %525 = vmatpush1.bf16.msra.mxu0 0
        %526 = vmatprep.subr.bf16.mxu0 0
        %527 = vmatpush1.bf16.msra.mxu0 0
        %528 = vmatprep.subr.bf16.mxu0 0
        %529 = vmatpush1.bf16.msra.mxu0 0
        %530 = vmatprep.subr.bf16.mxu0 0
        %531 = vmatpush1.bf16.msra.mxu0 0
        %532 = vmatprep.subr.bf16.mxu0 0
        %533 = vmatpush1.bf16.msra.mxu0 0
        %534 = vmatprep.subr.bf16.mxu0 0
        %535 = vmatpush1.bf16.msra.mxu0 0
        %536 = vmatprep.subr.bf16.mxu0 0
        %537 = vmatpush1.bf16.msra.mxu0 0
        %538 = vmatprep.subr.bf16.mxu0 0
        %539 = vmatpush1.bf16.msra.mxu0 0
        %540 = vmatprep.subr.bf16.mxu0 0
        %541 = vmatpush1.bf16.msra.mxu0 0
        %542 = vmatprep.mubr.bf16.mxu0 0
        %543 = vmatmul.mubr.bf16.gmra.mrb[0].mxu0 %v508
        %v544 = vpop.f32.mrb[0].mxu0
        %v545 = vadd.f32 %v493, %v544
        %v546 = vpop.f32.mrb[0].mxu0
        %v547 = vpop.f32.mrb[0].mxu0
        %v548 = vpop.f32.mrb[0].mxu0
        %549 = vdwg.mxu0
        %550 = vrot.lane.b32.xlu0 %v503, 96
        %v551 = vpop.permute.xlu0 %550
        %552 = vrot.lane.b32.xlu0 %v504, 96
        %v553 = vpop.permute.xlu0 %552
        %556 = vrot.lane.b32.xlu0 %v493, 96
        %v557 = vpop.permute.xlu0 %556
        %559 = vmatprep.subr.bf16.mxu0 0
        %560 = vmatpush1.bf16.msra.mxu0 %v551
        %561 = vmatprep.subr.bf16.mxu0 0
        %562 = vmatpush1.bf16.msra.mxu0 %v553
        %563 = vmatprep.subr.bf16.mxu0 0
        %564 = vmatpush1.bf16.msra.mxu0 0
        %565 = vmatprep.subr.bf16.mxu0 0
        %566 = vmatpush1.bf16.msra.mxu0 0
        %567 = vmatprep.subr.bf16.mxu0 0
        %568 = vmatpush1.bf16.msra.mxu0 0
        %569 = vmatprep.subr.bf16.mxu0 0
        %570 = vmatpush1.bf16.msra.mxu0 0
        %571 = vmatprep.subr.bf16.mxu0 0
        %572 = vmatpush1.bf16.msra.mxu0 0
        %573 = vmatprep.subr.bf16.mxu0 0
        %574 = vmatpush1.bf16.msra.mxu0 0
        %575 = vmatprep.subr.bf16.mxu0 0
        %576 = vmatpush1.bf16.msra.mxu0 0
        %577 = vmatprep.subr.bf16.mxu0 0
        %578 = vmatpush1.bf16.msra.mxu0 0
        %579 = vmatprep.subr.bf16.mxu0 0
        %580 = vmatpush1.bf16.msra.mxu0 0
        %581 = vmatprep.subr.bf16.mxu0 0
        %582 = vmatpush1.bf16.msra.mxu0 0
        %583 = vmatprep.subr.bf16.mxu0 0
        %584 = vmatpush1.bf16.msra.mxu0 0
        %585 = vmatprep.subr.bf16.mxu0 0
        %586 = vmatpush1.bf16.msra.mxu0 0
        %587 = vmatprep.subr.bf16.mxu0 0
        %588 = vmatpush1.bf16.msra.mxu0 0
        %589 = vmatprep.subr.bf16.mxu0 0
        %590 = vmatpush1.bf16.msra.mxu0 0
        %591 = vmatprep.mubr.bf16.mxu0 0
        %592 = vmatmul.mubr.bf16.gmra.mrb[0].mxu0 %v508
        %v593 = vpop.f32.mrb[0].mxu0
        %v594 = vadd.f32 %v557, %v593
        %v595 = vpop.f32.mrb[0].mxu0
        %v596 = vpop.f32.mrb[0].mxu0
        %v597 = vpop.f32.mrb[0].mxu0
        %598 = vdwg.mxu0
        %v599 = vpack.c.bf16 %v545, %v545
        %v600 = vpack.c.bf16 %v594, %v594
        %v601 = vld [vmem:[%s5] sm:$0xf]
        %v602 = vld [vmem:[%s5 + $0x4] sm:$0xf]
        %v603 = vld [vmem:[%s5 + $0x8] sm:$0xf]
        %v604 = vld [vmem:[%s5 + $0xc] sm:$0xf]
        %vm605 = vcmask 64512
        %v607 = vsel %vm605, %v599, 0
        %v610 = vsel %vm605, %v600, 0
        %612 = vmatprep.subr.bf16.mxu0 0
        %613 = vmatpush1.bf16.xpose.msra.mxu0 %v610
        %614 = vmatprep.subr.bf16.mxu0 0
        %615 = vmatpush1.bf16.xpose.msra.mxu0 0
        %616 = vmatprep.subr.bf16.mxu0 0
        %617 = vmatpush1.bf16.xpose.msra.mxu0 0
        %618 = vmatprep.subr.bf16.mxu0 0
        %619 = vmatpush1.bf16.xpose.msra.mxu0 0
        %620 = vmatprep.subr.bf16.mxu0 0
        %621 = vmatpush1.bf16.xpose.msra.mxu0 0
        %622 = vmatprep.subr.bf16.mxu0 0
        %623 = vmatpush1.bf16.xpose.msra.mxu0 0
        %624 = vmatprep.subr.bf16.mxu0 0
        %625 = vmatpush1.bf16.xpose.msra.mxu0 0
        %626 = vmatprep.subr.bf16.mxu0 0
        %627 = vmatpush1.bf16.xpose.msra.mxu0 0
        %628 = vmatprep.subr.bf16.mxu0 0
        %629 = vmatpush1.bf16.xpose.msra.mxu0 0
        %630 = vmatprep.subr.bf16.mxu0 0
        %631 = vmatpush1.bf16.xpose.msra.mxu0 0
        %632 = vmatprep.subr.bf16.mxu0 0
        %633 = vmatpush1.bf16.xpose.msra.mxu0 0
        %634 = vmatprep.subr.bf16.mxu0 0
        %635 = vmatpush1.bf16.xpose.msra.mxu0 0
        %636 = vmatprep.subr.bf16.mxu0 0
        %637 = vmatpush1.bf16.xpose.msra.mxu0 0
        %638 = vmatprep.subr.bf16.mxu0 0
        %639 = vmatpush1.bf16.xpose.msra.mxu0 0
        %640 = vmatprep.subr.bf16.mxu0 0
        %641 = vmatpush1.bf16.xpose.msra.mxu0 0
        %642 = vmatprep.subr.bf16.mxu0 0
        %643 = vmatpush1.bf16.xpose.msra.mxu0 0
        %644 = vmatprep.mubr.bf16.mxu0 0
        %645 = vmatmul.mubr.bf16.gmra.mrb[0].mxu0 %v607
        %v646 = vpop.f32.mrb[0].mxu0
        %v647 = vadd.f32 0.0, %v646
        %v648 = vpop.f32.mrb[0].mxu0
        %v649 = vpop.f32.mrb[0].mxu0
        %v650 = vpop.f32.mrb[0].mxu0
        %651 = vdwg.mxu0
        %v652 = vmul.f32 %v647, 0.35355338
        %v653 = vsel %vm605, %v652, -inf
        %654 = vmax.xlane.f32.xlu0 %v653
        %v655 = vpop.xlane.xlu0 %654
        %v656 = vsub.f32 %v652, %v655
        %v657 = vmul.f32 %v656, 1.442695
        %v658 = vpow.pop %v657
        %v659 = vsel %vm605, %v658, 0.0
        %660 = vadd.xlane.f32.xlu0 %v659
        %v661 = vpop.xlane.xlu0 %660
        %v662 = vrcp.pop %v661
        %v663 = vmul.f32 %v658, %v662
        %v664 = vpack.c.bf16 %v663, %v663
        %666 = vrot.lane.b32.xlu0 %v600, 96
        %v667 = vpop.permute.xlu0 %666
        %v669 = vsel %vm605, %v664, 0
        %vm671 = vcmask 1043456
        %v673 = vsel %vm671, %v667, 0
        %675 = vmatprep.subr.bf16.mxu0 0
        %676 = vmatpush1.bf16.msra.mxu0 %v673
        %677 = vmatprep.subr.bf16.mxu0 0
        %678 = vmatpush1.bf16.msra.mxu0 0
        %679 = vmatprep.subr.bf16.mxu0 0
        %680 = vmatpush1.bf16.msra.mxu0 0
        %681 = vmatprep.subr.bf16.mxu0 0
        %682 = vmatpush1.bf16.msra.mxu0 0
        %683 = vmatprep.subr.bf16.mxu0 0
        %684 = vmatpush1.bf16.msra.mxu0 0
        %685 = vmatprep.subr.bf16.mxu0 0
        %686 = vmatpush1.bf16.msra.mxu0 0
        %687 = vmatprep.subr.bf16.mxu0 0
        %688 = vmatpush1.bf16.msra.mxu0 0
        %689 = vmatprep.subr.bf16.mxu0 0
        %690 = vmatpush1.bf16.msra.mxu0 0
        %691 = vmatprep.subr.bf16.mxu0 0
        %692 = vmatpush1.bf16.msra.mxu0 0
        %693 = vmatprep.subr.bf16.mxu0 0
        %694 = vmatpush1.bf16.msra.mxu0 0
        %695 = vmatprep.subr.bf16.mxu0 0
        %696 = vmatpush1.bf16.msra.mxu0 0
        %697 = vmatprep.subr.bf16.mxu0 0
        %698 = vmatpush1.bf16.msra.mxu0 0
        %699 = vmatprep.subr.bf16.mxu0 0
        %700 = vmatpush1.bf16.msra.mxu0 0
        %701 = vmatprep.subr.bf16.mxu0 0
        %702 = vmatpush1.bf16.msra.mxu0 0
        %703 = vmatprep.subr.bf16.mxu0 0
        %704 = vmatpush1.bf16.msra.mxu0 0
        %705 = vmatprep.subr.bf16.mxu0 0
        %706 = vmatpush1.bf16.msra.mxu0 0
        %707 = vmatprep.mubr.bf16.mxu0 0
        %708 = vmatmul.mubr.bf16.gmra.mrb[0].mxu0 %v669
        %v709 = vpop.f32.mrb[0].mxu0
        %v710 = vadd.f32 0.0, %v709
        %v711 = vpop.f32.mrb[0].mxu0
        %v712 = vpop.f32.mrb[0].mxu0
        %v713 = vpop.f32.mrb[0].mxu0
        %714 = vdwg.mxu0
        %v715 = vpack.c.bf16 %v710, %v710
        %717 = vrot.lane.b32.xlu0 %v599, 120
        %v718 = vpop.permute.xlu0 %717
        %719 = vrot.lane.b32.xlu0 %v600, 120
        %v720 = vpop.permute.xlu0 %719
        %v722 = vsel %vm605, %v718, 0
        %v725 = vsel %vm605, %v720, 0
        %727 = vmatprep.subr.bf16.mxu0 0
        %728 = vmatpush1.bf16.xpose.msra.mxu0 %v725
        %729 = vmatprep.subr.bf16.mxu0 0
        %730 = vmatpush1.bf16.xpose.msra.mxu0 0
        %731 = vmatprep.subr.bf16.mxu0 0
        %732 = vmatpush1.bf16.xpose.msra.mxu0 0
        %733 = vmatprep.subr.bf16.mxu0 0
        %734 = vmatpush1.bf16.xpose.msra.mxu0 0
        %735 = vmatprep.subr.bf16.mxu0 0
        %736 = vmatpush1.bf16.xpose.msra.mxu0 0
        %737 = vmatprep.subr.bf16.mxu0 0
        %738 = vmatpush1.bf16.xpose.msra.mxu0 0
        %739 = vmatprep.subr.bf16.mxu0 0
        %740 = vmatpush1.bf16.xpose.msra.mxu0 0
        %741 = vmatprep.subr.bf16.mxu0 0
        %742 = vmatpush1.bf16.xpose.msra.mxu0 0
        %743 = vmatprep.subr.bf16.mxu0 0
        %744 = vmatpush1.bf16.xpose.msra.mxu0 0
        %745 = vmatprep.subr.bf16.mxu0 0
        %746 = vmatpush1.bf16.xpose.msra.mxu0 0
        %747 = vmatprep.subr.bf16.mxu0 0
        %748 = vmatpush1.bf16.xpose.msra.mxu0 0
        %749 = vmatprep.subr.bf16.mxu0 0
        %750 = vmatpush1.bf16.xpose.msra.mxu0 0
        %751 = vmatprep.subr.bf16.mxu0 0
        %752 = vmatpush1.bf16.xpose.msra.mxu0 0
        %753 = vmatprep.subr.bf16.mxu0 0
        %754 = vmatpush1.bf16.xpose.msra.mxu0 0
        %755 = vmatprep.subr.bf16.mxu0 0
        %756 = vmatpush1.bf16.xpose.msra.mxu0 0
        %757 = vmatprep.subr.bf16.mxu0 0
        %758 = vmatpush1.bf16.xpose.msra.mxu0 0
        %759 = vmatprep.mubr.bf16.mxu0 0
        %760 = vmatmul.mubr.bf16.gmra.mrb[0].mxu0 %v722
        %v761 = vpop.f32.mrb[0].mxu0
        %v762 = vadd.f32 0.0, %v761
        %v763 = vpop.f32.mrb[0].mxu0
        %v764 = vpop.f32.mrb[0].mxu0
        %v765 = vpop.f32.mrb[0].mxu0
        %766 = vdwg.mxu0
        %v767 = vmul.f32 %v762, 0.35355338
        %v768 = vsel %vm605, %v767, -inf
        %769 = vmax.xlane.f32.xlu0 %v768
        %v770 = vpop.xlane.xlu0 %769
        %v771 = vsub.f32 %v767, %v770
        %v772 = vmul.f32 %v771, 1.442695
        %v773 = vpow.pop %v772
        %v774 = vsel %vm605, %v773, 0.0
        %775 = vadd.xlane.f32.xlu0 %v774
        %v776 = vpop.xlane.xlu0 %775
        %v777 = vrcp.pop %v776
        %v778 = vmul.f32 %v773, %v777
        %v779 = vpack.c.bf16 %v778, %v778
        %780 = vrot.lane.b32.xlu0 %v600, 88
        %v781 = vpop.permute.xlu0 %780
        %v783 = vsel %vm605, %v779, 0
        %v786 = vsel %vm671, %v781, 0
        %788 = vmatprep.subr.bf16.mxu0 0
        %789 = vmatpush1.bf16.msra.mxu0 %v786
        %790 = vmatprep.subr.bf16.mxu0 0
        %791 = vmatpush1.bf16.msra.mxu0 0
        %792 = vmatprep.subr.bf16.mxu0 0
        %793 = vmatpush1.bf16.msra.mxu0 0
        %794 = vmatprep.subr.bf16.mxu0 0
        %795 = vmatpush1.bf16.msra.mxu0 0
        %796 = vmatprep.subr.bf16.mxu0 0
        %797 = vmatpush1.bf16.msra.mxu0 0
        %798 = vmatprep.subr.bf16.mxu0 0
        %799 = vmatpush1.bf16.msra.mxu0 0
        %800 = vmatprep.subr.bf16.mxu0 0
        %801 = vmatpush1.bf16.msra.mxu0 0
        %802 = vmatprep.subr.bf16.mxu0 0
        %803 = vmatpush1.bf16.msra.mxu0 0
        %804 = vmatprep.subr.bf16.mxu0 0
        %805 = vmatpush1.bf16.msra.mxu0 0
        %806 = vmatprep.subr.bf16.mxu0 0
        %807 = vmatpush1.bf16.msra.mxu0 0
        %808 = vmatprep.subr.bf16.mxu0 0
        %809 = vmatpush1.bf16.msra.mxu0 0
        %810 = vmatprep.subr.bf16.mxu0 0
        %811 = vmatpush1.bf16.msra.mxu0 0
        %812 = vmatprep.subr.bf16.mxu0 0
        %813 = vmatpush1.bf16.msra.mxu0 0
        %814 = vmatprep.subr.bf16.mxu0 0
        %815 = vmatpush1.bf16.msra.mxu0 0
        %816 = vmatprep.subr.bf16.mxu0 0
        %817 = vmatpush1.bf16.msra.mxu0 0
        %818 = vmatprep.subr.bf16.mxu0 0
        %819 = vmatpush1.bf16.msra.mxu0 0
        %820 = vmatprep.mubr.bf16.mxu0 0
        %821 = vmatmul.mubr.bf16.gmra.mrb[0].mxu0 %v783
        %v822 = vpop.f32.mrb[0].mxu0
        %v823 = vadd.f32 0.0, %v822
        %v824 = vpop.f32.mrb[0].mxu0
        %v825 = vpop.f32.mrb[0].mxu0
        %v826 = vpop.f32.mrb[0].mxu0
        %827 = vdwg.mxu0
        %v828 = vpack.c.bf16 %v823, %v823
        %v830 = vsel %vm605, %v828, 0
        %v833 = vsel %vm671, %v602, 0
        %835 = vmatprep.subr.bf16.mxu0 0
        %836 = vmatpush1.bf16.msra.mxu0 %v833
        %837 = vmatprep.subr.bf16.mxu0 0
        %838 = vmatpush1.bf16.msra.mxu0 0
        %839 = vmatprep.subr.bf16.mxu0 0
        %840 = vmatpush1.bf16.msra.mxu0 0
        %841 = vmatprep.subr.bf16.mxu0 0
        %842 = vmatpush1.bf16.msra.mxu0 0
        %843 = vmatprep.subr.bf16.mxu0 0
        %844 = vmatpush1.bf16.msra.mxu0 0
        %845 = vmatprep.subr.bf16.mxu0 0
        %846 = vmatpush1.bf16.msra.mxu0 0
        %847 = vmatprep.subr.bf16.mxu0 0
        %848 = vmatpush1.bf16.msra.mxu0 0
        %849 = vmatprep.subr.bf16.mxu0 0
        %850 = vmatpush1.bf16.msra.mxu0 0
        %851 = vmatprep.subr.bf16.mxu0 0
        %852 = vmatpush1.bf16.msra.mxu0 0
        %853 = vmatprep.subr.bf16.mxu0 0
        %854 = vmatpush1.bf16.msra.mxu0 0
        %855 = vmatprep.subr.bf16.mxu0 0
        %856 = vmatpush1.bf16.msra.mxu0 0
        %857 = vmatprep.subr.bf16.mxu0 0
        %858 = vmatpush1.bf16.msra.mxu0 0
        %859 = vmatprep.subr.bf16.mxu0 0
        %860 = vmatpush1.bf16.msra.mxu0 0
        %861 = vmatprep.subr.bf16.mxu0 0
        %862 = vmatpush1.bf16.msra.mxu0 0
        %863 = vmatprep.subr.bf16.mxu0 0
        %864 = vmatpush1.bf16.msra.mxu0 0
        %865 = vmatprep.subr.bf16.mxu0 0
        %866 = vmatpush1.bf16.msra.mxu0 0
        %867 = vmatprep.mubr.bf16.mxu0 0
        %868 = vmatmul.mubr.bf16.gmra.mrb[0].mxu0 %v830
        %v869 = vpop.f32.mrb[0].mxu0
        %v870 = vadd.f32 0.0, %v869
        %v871 = vpop.f32.mrb[0].mxu0
        %v872 = vpop.f32.mrb[0].mxu0
        %v873 = vpop.f32.mrb[0].mxu0
        %874 = vdwg.mxu0
        %v876 = vsel %vm605, %v715, 0
        %v879 = vsel %vm671, %v601, 0
        %881 = vmatprep.subr.bf16.mxu0 0
        %882 = vmatpush1.bf16.msra.mxu0 %v879
        %883 = vmatprep.subr.bf16.mxu0 0
        %884 = vmatpush1.bf16.msra.mxu0 0
        %885 = vmatprep.subr.bf16.mxu0 0
        %886 = vmatpush1.bf16.msra.mxu0 0
        %887 = vmatprep.subr.bf16.mxu0 0
        %888 = vmatpush1.bf16.msra.mxu0 0
        %889 = vmatprep.subr.bf16.mxu0 0
        %890 = vmatpush1.bf16.msra.mxu0 0
        %891 = vmatprep.subr.bf16.mxu0 0
        %892 = vmatpush1.bf16.msra.mxu0 0
        %893 = vmatprep.subr.bf16.mxu0 0
        %894 = vmatpush1.bf16.msra.mxu0 0
        %895 = vmatprep.subr.bf16.mxu0 0
        %896 = vmatpush1.bf16.msra.mxu0 0
        %897 = vmatprep.subr.bf16.mxu0 0
        %898 = vmatpush1.bf16.msra.mxu0 0
        %899 = vmatprep.subr.bf16.mxu0 0
        %900 = vmatpush1.bf16.msra.mxu0 0
        %901 = vmatprep.subr.bf16.mxu0 0
        %902 = vmatpush1.bf16.msra.mxu0 0
        %903 = vmatprep.subr.bf16.mxu0 0
        %904 = vmatpush1.bf16.msra.mxu0 0
        %905 = vmatprep.subr.bf16.mxu0 0
        %906 = vmatpush1.bf16.msra.mxu0 0
        %907 = vmatprep.subr.bf16.mxu0 0
        %908 = vmatpush1.bf16.msra.mxu0 0
        %909 = vmatprep.subr.bf16.mxu0 0
        %910 = vmatpush1.bf16.msra.mxu0 0
        %911 = vmatprep.subr.bf16.mxu0 0
        %912 = vmatpush1.bf16.msra.mxu0 0
        %913 = vmatprep.mubr.bf16.mxu0 0
        %914 = vmatmul.mubr.bf16.gmra.mrb[0].mxu0 %v876
        %v915 = vpop.f32.mrb[0].mxu0
        %v916 = vadd.f32 %v870, %v915
        %v917 = vpop.f32.mrb[0].mxu0
        %v918 = vpop.f32.mrb[0].mxu0
        %v919 = vpop.f32.mrb[0].mxu0
        %920 = vdwg.mxu0
        %921 = vrot.lane.b32.xlu0 %v599, 112
        %v922 = vpop.permute.xlu0 %921
        %923 = vrot.lane.b32.xlu0 %v600, 112
        %v924 = vpop.permute.xlu0 %923
        %v926 = vsel %vm605, %v922, 0
        %v929 = vsel %vm605, %v924, 0
        %931 = vmatprep.subr.bf16.mxu0 0
        %932 = vmatpush1.bf16.xpose.msra.mxu0 %v929
        %933 = vmatprep.subr.bf16.mxu0 0
        %934 = vmatpush1.bf16.xpose.msra.mxu0 0
        %935 = vmatprep.subr.bf16.mxu0 0
        %936 = vmatpush1.bf16.xpose.msra.mxu0 0
        %937 = vmatprep.subr.bf16.mxu0 0
        %938 = vmatpush1.bf16.xpose.msra.mxu0 0
        %939 = vmatprep.subr.bf16.mxu0 0
        %940 = vmatpush1.bf16.xpose.msra.mxu0 0
        %941 = vmatprep.subr.bf16.mxu0 0
        %942 = vmatpush1.bf16.xpose.msra.mxu0 0
        %943 = vmatprep.subr.bf16.mxu0 0
        %944 = vmatpush1.bf16.xpose.msra.mxu0 0
        %945 = vmatprep.subr.bf16.mxu0 0
        %946 = vmatpush1.bf16.xpose.msra.mxu0 0
        %947 = vmatprep.subr.bf16.mxu0 0
        %948 = vmatpush1.bf16.xpose.msra.mxu0 0
        %949 = vmatprep.subr.bf16.mxu0 0
        %950 = vmatpush1.bf16.xpose.msra.mxu0 0
        %951 = vmatprep.subr.bf16.mxu0 0
        %952 = vmatpush1.bf16.xpose.msra.mxu0 0
        %953 = vmatprep.subr.bf16.mxu0 0
        %954 = vmatpush1.bf16.xpose.msra.mxu0 0
        %955 = vmatprep.subr.bf16.mxu0 0
        %956 = vmatpush1.bf16.xpose.msra.mxu0 0
        %957 = vmatprep.subr.bf16.mxu0 0
        %958 = vmatpush1.bf16.xpose.msra.mxu0 0
        %959 = vmatprep.subr.bf16.mxu0 0
        %960 = vmatpush1.bf16.xpose.msra.mxu0 0
        %961 = vmatprep.subr.bf16.mxu0 0
        %962 = vmatpush1.bf16.xpose.msra.mxu0 0
        %963 = vmatprep.mubr.bf16.mxu0 0
        %964 = vmatmul.mubr.bf16.gmra.mrb[0].mxu0 %v926
        %v965 = vpop.f32.mrb[0].mxu0
        %v966 = vadd.f32 0.0, %v965
        %v967 = vpop.f32.mrb[0].mxu0
        %v968 = vpop.f32.mrb[0].mxu0
        %v969 = vpop.f32.mrb[0].mxu0
        %970 = vdwg.mxu0
        %v971 = vmul.f32 %v966, 0.35355338
        %v972 = vsel %vm605, %v971, -inf
        %973 = vmax.xlane.f32.xlu0 %v972
        %v974 = vpop.xlane.xlu0 %973
        %v975 = vsub.f32 %v971, %v974
        %v976 = vmul.f32 %v975, 1.442695
        %v977 = vpow.pop %v976
        %v978 = vsel %vm605, %v977, 0.0
        %979 = vadd.xlane.f32.xlu0 %v978
        %v980 = vpop.xlane.xlu0 %979
        %v981 = vrcp.pop %v980
        %v982 = vmul.f32 %v977, %v981
        %v983 = vpack.c.bf16 %v982, %v982
        %984 = vrot.lane.b32.xlu0 %v600, 80
        %v985 = vpop.permute.xlu0 %984
        %v987 = vsel %vm605, %v983, 0
        %v990 = vsel %vm671, %v985, 0
        %992 = vmatprep.subr.bf16.mxu0 0
        %993 = vmatpush1.bf16.msra.mxu0 %v990
        %994 = vmatprep.subr.bf16.mxu0 0
        %995 = vmatpush1.bf16.msra.mxu0 0
        %996 = vmatprep.subr.bf16.mxu0 0
        %997 = vmatpush1.bf16.msra.mxu0 0
        %998 = vmatprep.subr.bf16.mxu0 0
        %999 = vmatpush1.bf16.msra.mxu0 0
        %1000 = vmatprep.subr.bf16.mxu0 0
        %1001 = vmatpush1.bf16.msra.mxu0 0
        %1002 = vmatprep.subr.bf16.mxu0 0
        %1003 = vmatpush1.bf16.msra.mxu0 0
        %1004 = vmatprep.subr.bf16.mxu0 0
        %1005 = vmatpush1.bf16.msra.mxu0 0
        %1006 = vmatprep.subr.bf16.mxu0 0
        %1007 = vmatpush1.bf16.msra.mxu0 0
        %1008 = vmatprep.subr.bf16.mxu0 0
        %1009 = vmatpush1.bf16.msra.mxu0 0
        %1010 = vmatprep.subr.bf16.mxu0 0
        %1011 = vmatpush1.bf16.msra.mxu0 0
        %1012 = vmatprep.subr.bf16.mxu0 0
        %1013 = vmatpush1.bf16.msra.mxu0 0
        %1014 = vmatprep.subr.bf16.mxu0 0
        %1015 = vmatpush1.bf16.msra.mxu0 0
        %1016 = vmatprep.subr.bf16.mxu0 0
        %1017 = vmatpush1.bf16.msra.mxu0 0
        %1018 = vmatprep.subr.bf16.mxu0 0
        %1019 = vmatpush1.bf16.msra.mxu0 0
        %1020 = vmatprep.subr.bf16.mxu0 0
        %1021 = vmatpush1.bf16.msra.mxu0 0
        %1022 = vmatprep.subr.bf16.mxu0 0
        %1023 = vmatpush1.bf16.msra.mxu0 0
        %1024 = vmatprep.mubr.bf16.mxu0 0
        %1025 = vmatmul.mubr.bf16.gmra.mrb[0].mxu0 %v987
        %v1026 = vpop.f32.mrb[0].mxu0
        %v1027 = vadd.f32 0.0, %v1026
        %v1028 = vpop.f32.mrb[0].mxu0
        %v1029 = vpop.f32.mrb[0].mxu0
        %v1030 = vpop.f32.mrb[0].mxu0
        %1031 = vdwg.mxu0
        %v1032 = vpack.c.bf16 %v1027, %v1027
        %v1034 = vsel %vm605, %v1032, 0
        %v1037 = vsel %vm671, %v603, 0
        %1039 = vmatprep.subr.bf16.mxu0 0
        %1040 = vmatpush1.bf16.msra.mxu0 %v1037
        %1041 = vmatprep.subr.bf16.mxu0 0
        %1042 = vmatpush1.bf16.msra.mxu0 0
        %1043 = vmatprep.subr.bf16.mxu0 0
        %1044 = vmatpush1.bf16.msra.mxu0 0
        %1045 = vmatprep.subr.bf16.mxu0 0
        %1046 = vmatpush1.bf16.msra.mxu0 0
        %1047 = vmatprep.subr.bf16.mxu0 0
        %1048 = vmatpush1.bf16.msra.mxu0 0
        %1049 = vmatprep.subr.bf16.mxu0 0
        %1050 = vmatpush1.bf16.msra.mxu0 0
        %1051 = vmatprep.subr.bf16.mxu0 0
        %1052 = vmatpush1.bf16.msra.mxu0 0
        %1053 = vmatprep.subr.bf16.mxu0 0
        %1054 = vmatpush1.bf16.msra.mxu0 0
        %1055 = vmatprep.subr.bf16.mxu0 0
        %1056 = vmatpush1.bf16.msra.mxu0 0
        %1057 = vmatprep.subr.bf16.mxu0 0
        %1058 = vmatpush1.bf16.msra.mxu0 0
        %1059 = vmatprep.subr.bf16.mxu0 0
        %1060 = vmatpush1.bf16.msra.mxu0 0
        %1061 = vmatprep.subr.bf16.mxu0 0
        %1062 = vmatpush1.bf16.msra.mxu0 0
        %1063 = vmatprep.subr.bf16.mxu0 0
        %1064 = vmatpush1.bf16.msra.mxu0 0
        %1065 = vmatprep.subr.bf16.mxu0 0
        %1066 = vmatpush1.bf16.msra.mxu0 0
        %1067 = vmatprep.subr.bf16.mxu0 0
        %1068 = vmatpush1.bf16.msra.mxu0 0
        %1069 = vmatprep.subr.bf16.mxu0 0
        %1070 = vmatpush1.bf16.msra.mxu0 0
        %1071 = vmatprep.mubr.bf16.mxu0 0
        %1072 = vmatmul.mubr.bf16.gmra.mrb[0].mxu0 %v1034
        %v1073 = vpop.f32.mrb[0].mxu0
        %v1074 = vadd.f32 0.0, %v1073
        %v1075 = vpop.f32.mrb[0].mxu0
        %v1076 = vpop.f32.mrb[0].mxu0
        %v1077 = vpop.f32.mrb[0].mxu0
        %1078 = vdwg.mxu0
        %v1079 = vadd.f32 %v916, %v1074
        %1080 = vrot.lane.b32.xlu0 %v599, 104
        %v1081 = vpop.permute.xlu0 %1080
        %1082 = vrot.lane.b32.xlu0 %v600, 104
        %v1083 = vpop.permute.xlu0 %1082
        %v1085 = vsel %vm605, %v1081, 0
        %v1088 = vsel %vm605, %v1083, 0
        %1090 = vmatprep.subr.bf16.mxu0 0
        %1091 = vmatpush1.bf16.xpose.msra.mxu0 %v1088
        %1092 = vmatprep.subr.bf16.mxu0 0
        %1093 = vmatpush1.bf16.xpose.msra.mxu0 0
        %1094 = vmatprep.subr.bf16.mxu0 0
        %1095 = vmatpush1.bf16.xpose.msra.mxu0 0
        %1096 = vmatprep.subr.bf16.mxu0 0
        %1097 = vmatpush1.bf16.xpose.msra.mxu0 0
        %1098 = vmatprep.subr.bf16.mxu0 0
        %1099 = vmatpush1.bf16.xpose.msra.mxu0 0
        %1100 = vmatprep.subr.bf16.mxu0 0
        %1101 = vmatpush1.bf16.xpose.msra.mxu0 0
        %1102 = vmatprep.subr.bf16.mxu0 0
        %1103 = vmatpush1.bf16.xpose.msra.mxu0 0
        %1104 = vmatprep.subr.bf16.mxu0 0
        %1105 = vmatpush1.bf16.xpose.msra.mxu0 0
        %1106 = vmatprep.subr.bf16.mxu0 0
        %1107 = vmatpush1.bf16.xpose.msra.mxu0 0
        %1108 = vmatprep.subr.bf16.mxu0 0
        %1109 = vmatpush1.bf16.xpose.msra.mxu0 0
        %1110 = vmatprep.subr.bf16.mxu0 0
        %1111 = vmatpush1.bf16.xpose.msra.mxu0 0
        %1112 = vmatprep.subr.bf16.mxu0 0
        %1113 = vmatpush1.bf16.xpose.msra.mxu0 0
        %1114 = vmatprep.subr.bf16.mxu0 0
        %1115 = vmatpush1.bf16.xpose.msra.mxu0 0
        %1116 = vmatprep.subr.bf16.mxu0 0
        %1117 = vmatpush1.bf16.xpose.msra.mxu0 0
        %1118 = vmatprep.subr.bf16.mxu0 0
        %1119 = vmatpush1.bf16.xpose.msra.mxu0 0
        %1120 = vmatprep.subr.bf16.mxu0 0
        %1121 = vmatpush1.bf16.xpose.msra.mxu0 0
        %1122 = vmatprep.mubr.bf16.mxu0 0
        %1123 = vmatmul.mubr.bf16.gmra.mrb[0].mxu0 %v1085
        %v1124 = vpop.f32.mrb[0].mxu0
        %v1125 = vadd.f32 0.0, %v1124
        %v1126 = vpop.f32.mrb[0].mxu0
        %v1127 = vpop.f32.mrb[0].mxu0
        %v1128 = vpop.f32.mrb[0].mxu0
        %1129 = vdwg.mxu0
        %v1130 = vmul.f32 %v1125, 0.35355338
        %v1131 = vsel %vm605, %v1130, -inf
        %1132 = vmax.xlane.f32.xlu0 %v1131
        %v1133 = vpop.xlane.xlu0 %1132
        %v1134 = vsub.f32 %v1130, %v1133
        %v1135 = vmul.f32 %v1134, 1.442695
        %v1136 = vpow.pop %v1135
        %v1137 = vsel %vm605, %v1136, 0.0
        %1138 = vadd.xlane.f32.xlu0 %v1137
        %v1139 = vpop.xlane.xlu0 %1138
        %v1140 = vrcp.pop %v1139
        %v1141 = vmul.f32 %v1136, %v1140
        %v1142 = vpack.c.bf16 %v1141, %v1141
        %1143 = vrot.lane.b32.xlu0 %v600, 72
        %v1144 = vpop.permute.xlu0 %1143
        %v1146 = vsel %vm605, %v1142, 0
        %v1149 = vsel %vm671, %v1144, 0
        %1151 = vmatprep.subr.bf16.mxu0 0
        %1152 = vmatpush1.bf16.msra.mxu0 %v1149
        %1153 = vmatprep.subr.bf16.mxu0 0
        %1154 = vmatpush1.bf16.msra.mxu0 0
        %1155 = vmatprep.subr.bf16.mxu0 0
        %1156 = vmatpush1.bf16.msra.mxu0 0
        %1157 = vmatprep.subr.bf16.mxu0 0
        %1158 = vmatpush1.bf16.msra.mxu0 0
        %1159 = vmatprep.subr.bf16.mxu0 0
        %1160 = vmatpush1.bf16.msra.mxu0 0
        %1161 = vmatprep.subr.bf16.mxu0 0
        %1162 = vmatpush1.bf16.msra.mxu0 0
        %1163 = vmatprep.subr.bf16.mxu0 0
        %1164 = vmatpush1.bf16.msra.mxu0 0
        %1165 = vmatprep.subr.bf16.mxu0 0
        %1166 = vmatpush1.bf16.msra.mxu0 0
        %1167 = vmatprep.subr.bf16.mxu0 0
        %1168 = vmatpush1.bf16.msra.mxu0 0
        %1169 = vmatprep.subr.bf16.mxu0 0
        %1170 = vmatpush1.bf16.msra.mxu0 0
        %1171 = vmatprep.subr.bf16.mxu0 0
        %1172 = vmatpush1.bf16.msra.mxu0 0
        %1173 = vmatprep.subr.bf16.mxu0 0
        %1174 = vmatpush1.bf16.msra.mxu0 0
        %1175 = vmatprep.subr.bf16.mxu0 0
        %1176 = vmatpush1.bf16.msra.mxu0 0
        %1177 = vmatprep.subr.bf16.mxu0 0
        %1178 = vmatpush1.bf16.msra.mxu0 0
        %1179 = vmatprep.subr.bf16.mxu0 0
        %1180 = vmatpush1.bf16.msra.mxu0 0
        %1181 = vmatprep.subr.bf16.mxu0 0
        %1182 = vmatpush1.bf16.msra.mxu0 0
        %1183 = vmatprep.mubr.bf16.mxu0 0
        %1184 = vmatmul.mubr.bf16.gmra.mrb[0].mxu0 %v1146
        %v1185 = vpop.f32.mrb[0].mxu0
        %v1186 = vadd.f32 0.0, %v1185
        %v1187 = vpop.f32.mrb[0].mxu0
        %v1188 = vpop.f32.mrb[0].mxu0
        %v1189 = vpop.f32.mrb[0].mxu0
        %1190 = vdwg.mxu0
        %v1191 = vpack.c.bf16 %v1186, %v1186
        %v1193 = vsel %vm605, %v1191, 0
        %v1196 = vsel %vm671, %v604, 0
        %1198 = vmatprep.subr.bf16.mxu0 0
        %1199 = vmatpush1.bf16.msra.mxu0 %v1196
        %1200 = vmatprep.subr.bf16.mxu0 0
        %1201 = vmatpush1.bf16.msra.mxu0 0
        %1202 = vmatprep.subr.bf16.mxu0 0
        %1203 = vmatpush1.bf16.msra.mxu0 0
        %1204 = vmatprep.subr.bf16.mxu0 0
        %1205 = vmatpush1.bf16.msra.mxu0 0
        %1206 = vmatprep.subr.bf16.mxu0 0
        %1207 = vmatpush1.bf16.msra.mxu0 0
        %1208 = vmatprep.subr.bf16.mxu0 0
        %1209 = vmatpush1.bf16.msra.mxu0 0
        %1210 = vmatprep.subr.bf16.mxu0 0
        %1211 = vmatpush1.bf16.msra.mxu0 0
        %1212 = vmatprep.subr.bf16.mxu0 0
        %1213 = vmatpush1.bf16.msra.mxu0 0
        %1214 = vmatprep.subr.bf16.mxu0 0
        %1215 = vmatpush1.bf16.msra.mxu0 0
        %1216 = vmatprep.subr.bf16.mxu0 0
        %1217 = vmatpush1.bf16.msra.mxu0 0
        %1218 = vmatprep.subr.bf16.mxu0 0
        %1219 = vmatpush1.bf16.msra.mxu0 0
        %1220 = vmatprep.subr.bf16.mxu0 0
        %1221 = vmatpush1.bf16.msra.mxu0 0
        %1222 = vmatprep.subr.bf16.mxu0 0
        %1223 = vmatpush1.bf16.msra.mxu0 0
        %1224 = vmatprep.subr.bf16.mxu0 0
        %1225 = vmatpush1.bf16.msra.mxu0 0
        %1226 = vmatprep.subr.bf16.mxu0 0
        %1227 = vmatpush1.bf16.msra.mxu0 0
        %1228 = vmatprep.subr.bf16.mxu0 0
        %1229 = vmatpush1.bf16.msra.mxu0 0
        %1230 = vmatprep.mubr.bf16.mxu0 0
        %1231 = vmatmul.mubr.bf16.gmra.mrb[0].mxu0 %v1193
        %v1232 = vpop.f32.mrb[0].mxu0
        %v1233 = vadd.f32 0.0, %v1232
        %v1234 = vpop.f32.mrb[0].mxu0
        %v1235 = vpop.f32.mrb[0].mxu0
        %v1236 = vpop.f32.mrb[0].mxu0
        %1237 = vdwg.mxu0
        %v1238 = vadd.f32 %v1079, %v1233
        %v1239 = vld [vmem:[%s6] sm:$0x1]
        %v1241 = vlaneseq
        %v1242 = vshrl.u32 %v1241, 7
        %v1243 = vsub.s32 0, %v1242
        %v1244 = vrot.slane %v1239, %v1243
        %v1246 = vadd.f32 %v1238, %v1244
        %v1247 = vadd.f32 %v451, %v1246
        %v1248 = vld [vmem:[%s7] sm:$0x1]
        %v1249 = vld [vmem:[%s8] sm:$0x1]
        %v1250 = vsel %vm454, %v1247, 0.0
        %1251 = vadd.xlane.f32.xlu0 %v1250
        %v1252 = vpop.xlane.xlu0 %1251
        %v1253 = vmul.f32 %v1252, %v458
        %v1254 = vsub.f32 %v1247, %v1253
        %v1255 = vmul.f32 %v1254, %v1254
        %v1256 = vsel %vm454, %v1255, 0.0
        %1257 = vadd.xlane.f32.xlu0 %v1256
        %v1258 = vpop.xlane.xlu0 %1257
        %v1259 = vmul.f32 %v1258, %v458
        %v1260 = vadd.f32 %v1259, 1e-06
        %v1261 = vrsqrt.pop %v1260
        %v1262 = vmul.f32 %v1254, %v1261
        %v1264 = vlaneseq
        %v1265 = vshrl.u32 %v1264, 7
        %v1266 = vsub.s32 0, %v1265
        %v1267 = vrot.slane %v1248, %v1266
        %v1269 = vmul.f32 %v1262, %v1267
        %v1271 = vlaneseq
        %v1272 = vshrl.u32 %v1271, 7
        %v1273 = vsub.s32 0, %v1272
        %v1274 = vrot.slane %v1249, %v1273
        %v1276 = vadd.f32 %v1269, %v1274
        %v1277 = vpack.c.bf16 %v1276, %v1276
        %v1278 = vld [vmem:[%s9] sm:$0xf]
        %v1279 = vld [vmem:[%s9 + $0x4] sm:$0xf]
        %v1280 = vld [vmem:[%s9 + $0x8] sm:$0xf]
        %v1281 = vld [vmem:[%s9 + $0xc] sm:$0xf]
        %v1282 = vld [vmem:[%s10] sm:$0x1]
        %v1284 = vlaneseq
        %v1285 = vshrl.u32 %v1284, 7
        %v1286 = vsub.s32 0, %v1285
        %v1287 = vrot.slane %v1282, %v1286
        %v1293 = vunpack.c.l.b16 %v1278
        %v1294 = vunpack.c.l.b16 %v1279
        %v1295 = vunpack.c.l.b16 %v1280
        %v1296 = vunpack.c.l.b16 %v1281
        %v1297 = vpack.c.b16 %v1294, %v1293
        %v1298 = vpack.c.b16 %v1296, %v1295
        %v1302 = vsel %vm454, %v1277, 0
        %1304 = vmatprep.subr.bf16.mxu0 0
        %1305 = vmatpush1.bf16.msra.mxu0 %v1297
        %1306 = vmatprep.subr.bf16.mxu0 0
        %1307 = vmatpush1.bf16.msra.mxu0 %v1298
        %1308 = vmatprep.subr.bf16.mxu0 0
        %1309 = vmatpush1.bf16.msra.mxu0 0
        %1310 = vmatprep.subr.bf16.mxu0 0
        %1311 = vmatpush1.bf16.msra.mxu0 0
        %1312 = vmatprep.subr.bf16.mxu0 0
        %1313 = vmatpush1.bf16.msra.mxu0 0
        %1314 = vmatprep.subr.bf16.mxu0 0
        %1315 = vmatpush1.bf16.msra.mxu0 0
        %1316 = vmatprep.subr.bf16.mxu0 0
        %1317 = vmatpush1.bf16.msra.mxu0 0
        %1318 = vmatprep.subr.bf16.mxu0 0
        %1319 = vmatpush1.bf16.msra.mxu0 0
        %1320 = vmatprep.subr.bf16.mxu0 0
        %1321 = vmatpush1.bf16.msra.mxu0 0
        %1322 = vmatprep.subr.bf16.mxu0 0
        %1323 = vmatpush1.bf16.msra.mxu0 0
        %1324 = vmatprep.subr.bf16.mxu0 0
        %1325 = vmatpush1.bf16.msra.mxu0 0
        %1326 = vmatprep.subr.bf16.mxu0 0
        %1327 = vmatpush1.bf16.msra.mxu0 0
        %1328 = vmatprep.subr.bf16.mxu0 0
        %1329 = vmatpush1.bf16.msra.mxu0 0
        %1330 = vmatprep.subr.bf16.mxu0 0
        %1331 = vmatpush1.bf16.msra.mxu0 0
        %1332 = vmatprep.subr.bf16.mxu0 0
        %1333 = vmatpush1.bf16.msra.mxu0 0
        %1334 = vmatprep.subr.bf16.mxu0 0
        %1335 = vmatpush1.bf16.msra.mxu0 0
        %1336 = vmatprep.mubr.bf16.mxu0 0
        %1337 = vmatmul.mubr.bf16.gmra.mrb[0].mxu0 %v1302
        %v1338 = vpop.f32.mrb[0].mxu0
        %v1339 = vadd.f32 %v1287, %v1338
        %v1340 = vpop.f32.mrb[0].mxu0
        %v1341 = vpop.f32.mrb[0].mxu0
        %v1342 = vpop.f32.mrb[0].mxu0
        %1343 = vdwg.mxu0
        %v1344 = vmul.f32 %v1339, 0.5
        %v1345 = vmul.f32 %v1339, %v1339
        %v1346 = vmul.f32 %v1345, %v1339
        %v1347 = vmul.f32 %v1346, 0.044715
        %v1348 = vadd.f32 %v1339, %v1347
        %v1349 = vmul.f32 %v1348, 0.7978846
        %v1350 = vtanh.pop %v1349
        %v1351 = vadd.f32 %v1350, 1.0
        %v1352 = vmul.f32 %v1344, %v1351
        %v1353 = vpack.c.bf16 %v1352, %v1352
        %v1354 = vld [vmem:[%s11] sm:$0xf]
        %v1355 = vld [vmem:[%s11 + $0x4] sm:$0xf]
        %v1356 = vld [vmem:[%s11 + $0x8] sm:$0xf]
        %v1357 = vld [vmem:[%s11 + $0xc] sm:$0xf]
        %v1358 = vld [vmem:[%s11 + $0x10] sm:$0xf]
        %v1359 = vld [vmem:[%s11 + $0x14] sm:$0xf]
        %v1360 = vld [vmem:[%s11 + $0x18] sm:$0xf]
        %v1361 = vld [vmem:[%s11 + $0x1c] sm:$0xf]
        %v1362 = vld [vmem:[%s11 + $0x20] sm:$0xf]
        %v1363 = vld [vmem:[%s11 + $0x24] sm:$0xf]
        %v1364 = vld [vmem:[%s11 + $0x28] sm:$0xf]
        %v1365 = vld [vmem:[%s11 + $0x2c] sm:$0xf]
        %v1366 = vld [vmem:[%s11 + $0x30] sm:$0xf]
        %v1367 = vld [vmem:[%s11 + $0x34] sm:$0xf]
        %v1368 = vld [vmem:[%s11 + $0x38] sm:$0xf]
        %v1369 = vld [vmem:[%s11 + $0x3c] sm:$0xf]
        %v1370 = vld [vmem:[%s12] sm:$0x1]
        %v1372 = vlaneseq
        %v1373 = vshrl.u32 %v1372, 7
        %v1374 = vsub.s32 0, %v1373
        %v1375 = vrot.slane %v1370, %v1374
        %v1393 = vunpack.c.l.b16 %v1354
        %v1394 = vunpack.c.l.b16 %v1355
        %v1395 = vunpack.c.l.b16 %v1356
        %v1396 = vunpack.c.l.b16 %v1357
        %v1397 = vunpack.c.l.b16 %v1358
        %v1398 = vunpack.c.l.b16 %v1359
        %v1399 = vunpack.c.l.b16 %v1360
        %v1400 = vunpack.c.l.b16 %v1361
        %v1401 = vunpack.c.l.b16 %v1362
        %v1402 = vunpack.c.l.b16 %v1363
        %v1403 = vunpack.c.l.b16 %v1364
        %v1404 = vunpack.c.l.b16 %v1365
        %v1405 = vunpack.c.l.b16 %v1366
        %v1406 = vunpack.c.l.b16 %v1367
        %v1407 = vunpack.c.l.b16 %v1368
        %v1408 = vunpack.c.l.b16 %v1369
        %v1409 = vpack.c.b16 %v1394, %v1393
        %v1410 = vpack.c.b16 %v1396, %v1395
        %v1411 = vpack.c.b16 %v1398, %v1397
        %v1412 = vpack.c.b16 %v1400, %v1399
        %v1413 = vpack.c.b16 %v1402, %v1401
        %v1414 = vpack.c.b16 %v1404, %v1403
        %v1415 = vpack.c.b16 %v1406, %v1405
        %v1416 = vpack.c.b16 %v1408, %v1407
        %1425 = vmatprep.subr.bf16.mxu0 0
        %1426 = vmatpush1.bf16.msra.mxu0 %v1409
        %1427 = vmatprep.subr.bf16.mxu0 0
        %1428 = vmatpush1.bf16.msra.mxu0 %v1410
        %1429 = vmatprep.subr.bf16.mxu0 0
        %1430 = vmatpush1.bf16.msra.mxu0 %v1411
        %1431 = vmatprep.subr.bf16.mxu0 0
        %1432 = vmatpush1.bf16.msra.mxu0 %v1412
        %1433 = vmatprep.subr.bf16.mxu0 0
        %1434 = vmatpush1.bf16.msra.mxu0 %v1413
        %1435 = vmatprep.subr.bf16.mxu0 0
        %1436 = vmatpush1.bf16.msra.mxu0 %v1414
        %1437 = vmatprep.subr.bf16.mxu0 0
        %1438 = vmatpush1.bf16.msra.mxu0 %v1415
        %1439 = vmatprep.subr.bf16.mxu0 0
        %1440 = vmatpush1.bf16.msra.mxu0 %v1416
        %1441 = vmatprep.subr.bf16.mxu0 0
        %1442 = vmatpush1.bf16.msra.mxu0 0
        %1443 = vmatprep.subr.bf16.mxu0 0
        %1444 = vmatpush1.bf16.msra.mxu0 0
        %1445 = vmatprep.subr.bf16.mxu0 0
        %1446 = vmatpush1.bf16.msra.mxu0 0
        %1447 = vmatprep.subr.bf16.mxu0 0
        %1448 = vmatpush1.bf16.msra.mxu0 0
        %1449 = vmatprep.subr.bf16.mxu0 0
        %1450 = vmatpush1.bf16.msra.mxu0 0
        %1451 = vmatprep.subr.bf16.mxu0 0
        %1452 = vmatpush1.bf16.msra.mxu0 0
        %1453 = vmatprep.subr.bf16.mxu0 0
        %1454 = vmatpush1.bf16.msra.mxu0 0
        %1455 = vmatprep.subr.bf16.mxu0 0
        %1456 = vmatpush1.bf16.msra.mxu0 0
        %1457 = vmatprep.mubr.bf16.mxu0 0
        %1458 = vmatmul.mubr.bf16.gmra.mrb[0].mxu0 %v1353
        %v1459 = vpop.f32.mrb[0].mxu0
        %v1460 = vadd.f32 %v1375, %v1459
        %v1461 = vpop.f32.mrb[0].mxu0
        %v1462 = vpop.f32.mrb[0].mxu0
        %v1463 = vpop.f32.mrb[0].mxu0
        %1464 = vdwg.mxu0
        %v1465 = vadd.f32 %v1247, %v1460
        %1466 = vst.msk [vmem:[%s445] sm:$0xff] %vm454, %v1465
        %s1467 = sand.u32 %s327, 1
        %s1468 = scalar_lea.sflag [#allocation3], %s1467
        %s1469 = sand.u32 %s327, 1
        %s1470 = smul.addr %s1469, 8
        %s1471 = scalar_lea.vmem [#allocation2], %s1470
        // Predicated region
        $region73: #{tpu_custom_call.1} parent=71 // pred_check
          %p1472 = pneg %p337
        $region74: #{tpu_custom_call.1} parent=71 // pred_check_branch
          %1474 = sbr.rel (%p1472) target = $region76
        $region75: #{tpu_custom_call.1} parent=71 // pred_region
          %s1476 = ssub.s32 128, 128
          %1477 = vsyncadd %s1468, %s1476
          %s1478 = sadd.s32 %s32, %s31
          %s1479 = smul.addr %s1478, 128
          %s1480 = scalar_lea.hbm %s13, %s1479
          %s1482 = sshll.u32 %s1471, 4
          %s1483 = int_to_ptr.vmem [resolvable:$true] %s1482
          %1485 = dma.vmem_to_hbm [thread:$0]  %s1483, 128, %s1480, %s1468
        $region76: #{tpu_custom_call.1} parent=71 // pred_fallthru
          _
      $region72: #{tpu_custom_call.1} parent=5 // pred_fallthru
        _
      %p1486 = scmp.le.s32.totalorder 2, %s22
      // Predicated region
      $region77: #{tpu_custom_call.1} parent=5 // pred_check
        %p1487 = pneg %p1486
      $region78: #{tpu_custom_call.1} parent=5 // pred_check_branch
        %1489 = sbr.rel (%p1487) target = $region80
      $region79: #{tpu_custom_call.1} parent=5 // pred_region
        %s1490 = ssub.s32 %s22, 2
        // Predicated region
        $region81: #{tpu_custom_call.1} parent=79 // pred_check
          %p1491 = pneg %p343
        $region82: #{tpu_custom_call.1} parent=79 // pred_check_branch
          %1493 = sbr.rel (%p1491) target = $region84
        $region83: #{tpu_custom_call.1} parent=79 // pred_region
          %s1494 = sand.u32 %s328, 1
          %s1495 = scalar_lea.sflag [#allocation3], %s1494
          %s1496 = sand.u32 %s328, 1
          %s1497 = smul.addr %s1496, 8
          %s1498 = scalar_lea.vmem [#allocation2], %s1497
          %1499 = dma.done %s1495, 128
        $region84: #{tpu_custom_call.1} parent=79 // pred_fallthru
          _
      $region80: #{tpu_custom_call.1} parent=5 // pred_fallthru
        _
    $region6: #{tpu_custom_call.1} parent=1 // loop_footer
      %s26 = sadd.s32 1, %s22
    $region7: #{tpu_custom_call.1} parent=1 // loop_footer_branch
      %21 = sbr.rel target = $region3
    $region8: #{tpu_custom_call.1} parent=1 // loop_exit
      _
    %1500 = vsyncpa [#allocation3], 1
    %s1501 = scalar_lea.sflag [#allocation3], 1
    %1502 = vsyncpa %s1501, 1

</llo_original>
